<compile_context>
chip_gen: v6e
topology: v6e:2x2x1
jax: 0.10.0
libtpu: 0.0.40
codegen_flags: <defaults>
</compile_context>

<pallas_src>
import math
import functools

import jax
import jax.numpy as jnp
from jax.experimental import pallas as pl
from jax.experimental.pallas import tpu as pltpu

LANE = 128


def autopad(k, p=None, d=1):
    if d > 1:
        k = d * (k - 1) + 1 if isinstance(k, int) else [d * (x - 1) + 1 for x in k]
    if p is None:
        p = k // 2 if isinstance(k, int) else [x // 2 for x in k]
    return p


def _round_up(x, m):
    return ((x + m - 1) // m) * m


def _padded_tile_bytes(shape, dtype):
    """Rough VMEM footprint of a tile after (sublane, lane) layout padding."""
    itemsize = jnp.dtype(dtype).itemsize
    shape = tuple(int(d) for d in shape)
    if len(shape) == 0:
        return itemsize
    if len(shape) == 1:
        return _round_up(shape[0], LANE) * itemsize
    lead = 1
    for d in shape[:-2]:
        lead *= d
    sub = 8 * max(1, 4 // itemsize)          # 8 (f32), 16 (bf16), 32 (int8)
    return lead * _round_up(shape[-2], sub) * _round_up(shape[-1], LANE) * itemsize


def _pick_th(ho, wo, m_target):
    """Largest divisor of Ho whose output-row tile keeps M = TH*Wo <= m_target."""
    best = 1
    for t in range(1, ho + 1):
        if ho % t == 0 and t * wo <= m_target:
            best = t
    return best


def _conv_bn_silu_kernel(xt_ref, w_ref, scale_ref, bias_ref, o_ref, patch_ref,
                         *, k, s, th, wo, c1):
    """One (image, row-tile, C2-tile) grid step.

    xt_ref   : (TH_in, Wp, C1)   halo'ed padded-NHWC input rows (compute dtype)
    w_ref    : (Kc, TN_mat)      im2col-ordered weight tile, Kc = k*k*C1
    scale_ref: (1, TN_mat)       fused BN scale = gamma / sqrt(var + eps)   (f32)
    bias_ref : (1, TN_mat)       fused BN bias  = beta - mean * scale       (f32)
    o_ref    : (TH, Wo, TN_out)  output tile (TN_out <= TN_mat)
    patch_ref: (TH*Wo, Kc)       VMEM scratch holding the im2col patch
    """
    m = th * wo

    # Build the im2col patch once per (image, row-tile).  The C2-tile grid axis
    # is innermost and "arbitrary" (sequential), so j==0 always runs before the
    # other C2 tiles of this (n, h) and the scratch stays valid across them.
    @pl.when(pl.program_id(2) == 0)
    def _build_patch():
        for kh in range(k):
            for kw in range(k):
                if s == 1:
                    a = xt_ref[kh:kh + th, kw:kw + wo, :]
                else:
                    # TODO(synk): space-to-depth phase split in the wrapper would
                    # turn these strided sublane reads into dense slices.
                    a = xt_ref[pl.ds(kh, th, stride=s), pl.ds(kw, wo, stride=s), :]
                col = (kh * k + kw) * c1
                patch_ref[:, col:col + c1] = a.reshape(m, c1)

    # Single MXU contraction with K = k*k*C1 (instead of k*k matmuls with K = C1).
    acc = jnp.dot(patch_ref[...], w_ref[...], preferred_element_type=jnp.float32)

    # Fused BN affine + SiLU epilogue (f32), only on the real output channels.
    tn_out = o_ref.shape[-1]
    acc = acc[:, :tn_out]
    y = acc * scale_ref[:, :tn_out] + bias_ref[:, :tn_out]
    y = y * jax.nn.sigmoid(y)
    o_ref[...] = y.reshape(o_ref.shape).astype(o_ref.dtype)


def conv_forward(x, weight, gamma, beta, running_mean, running_var,
                 k=1, s=1, p=None, g=1, d=1, eps=1e-5,
                 compute_dtype=jnp.float32, out_dtype=jnp.float32,
                 tn=LANE, m_target=1024):
    """SiLU(BN(Conv2d(x, weight, stride=s, padding=autopad(k,p,d), bias=False))).

    x: (N, C1, H, W) float32 (NCHW).  Returns NCHW in `out_dtype`.
    """
    assert isinstance(k, int), "tuple kernel sizes not supported"
    assert d == 1, "dilation > 1 not supported"
    assert g == 1, "grouped conv not supported"
    pad = autopad(k, p, d)
    assert isinstance(pad, int)

    N, C1, H, W = x.shape
    C2 = weight.shape[0]
    assert weight.shape == (C2, C1, k, k)
    Ho = (H + 2 * pad - k) // s + 1
    Wo = (W + 2 * pad - k) // s + 1
    Hp, Wp = H + 2 * pad, W + 2 * pad
    Kc = k * k * C1

    # ---- output-channel tiling ----
    TN_mat = max(int(tn), LANE)                  # MXU N tile (lane-dense, >= 128)
    C2_mat = max(_round_up(C2, TN_mat), TN_mat)  # matmul/weight width
    JT = C2_mat // TN_mat
    # Single C2 tile -> keep HBM output unpadded (no 16x write blow-up at tiny C2);
    # multiple tiles -> pad so every stored tile is a full lane-dense TN_mat block.
    C2_out = C2 if JT == 1 else C2_mat
    TN_out = min(C2_out, TN_mat)

    # ---- spatial (output-row) tiling with halo ----
    TH = _pick_th(Ho, Wo, m_target)
    HT = Ho // TH
    TH_in = (TH - 1) * s + k
    M = TH * Wo

    # ---- wrapper-side layout passes (no k*k im2col blow-up in HBM) ----
    xp = jnp.pad(x.transpose(0, 2, 3, 1),
                 ((0, 0), (pad, pad), (pad, pad), (0, 0))).astype(compute_dtype)
    # Overlapping (halo) row windows so every Pallas block is a plain Blocked tile.
    x_tiles = jnp.stack([xp[:, h * TH * s: h * TH * s + TH_in] for h in range(HT)],
                        axis=1)                              # (N, HT, TH_in, Wp, C1)

    # (C2, C1, k, k) -> (k, k, C1, C2) -> (Kc, C2_mat); column order (kh, kw, c1)
    # matches the in-kernel patch layout.
    w2 = weight.transpose(2, 3, 1, 0).reshape(Kc, C2)
    w2 = jnp.pad(w2, ((0, 0), (0, C2_mat - C2))).astype(compute_dtype)

    # Fused eval-mode BN affine; padded channels get scale = bias = 0.
    scale = gamma / jnp.sqrt(running_var + eps)
    bias = beta - running_mean * scale
    scale = jnp.pad(scale, (0, C2_mat - C2)).reshape(1, C2_mat).astype(jnp.float32)
    bias = jnp.pad(bias, (0, C2_mat - C2)).reshape(1, C2_mat).astype(jnp.float32)

    kernel = functools.partial(_conv_bn_silu_kernel, k=k, s=s, th=TH, wo=Wo, c1=C1)

    # ---- VMEM budget derived from the actual block sizes ----
    vmem_need = (
        2 * _padded_tile_bytes((TH_in, Wp, C1), compute_dtype)   # input tile  (dbl-buf)
        + 2 * _padded_tile_bytes((Kc, TN_mat), compute_dtype)    # weight tile (dbl-buf)
        + 4 * _padded_tile_bytes((1, TN_mat), jnp.float32)       # scale + bias
        + 2 * _padded_tile_bytes((TH, Wo, TN_out), out_dtype)    # output tile (dbl-buf)
        + _padded_tile_bytes((M, Kc), compute_dtype)             # im2col scratch
        + 4 * _padded_tile_bytes((M, TN_mat), jnp.float32))      # epilogue temps
    vmem_limit = int(min(100 * 1024 * 1024, max(32 * 1024 * 1024, 2 * vmem_need)))

    cost = pl.CostEstimate(
        flops=2 * N * Ho * Wo * Kc * C2_mat,
        transcendentals=N * Ho * Wo * C2_out,
        bytes_accessed=(x_tiles.size * x_tiles.dtype.itemsize
                        + w2.size * w2.dtype.itemsize
                        + scale.size * 4 + bias.size * 4
                        + N * Ho * Wo * C2_out * jnp.dtype(out_dtype).itemsize))

    out = pl.pallas_call(
        kernel,
        out_shape=jax.ShapeDtypeStruct((N, Ho, Wo, C2_out), out_dtype),
        grid=(N, HT, JT),
        in_specs=[
            # Input-tile block index depends only on (n, h): it stays VMEM-resident
            # across the innermost C2-tile axis (no re-DMA of the big slab).
            pl.BlockSpec((None, None, TH_in, Wp, C1), lambda n, h, j: (n, h, 0, 0, 0)),
            pl.BlockSpec((Kc, TN_mat), lambda n, h, j: (0, j)),
            pl.BlockSpec((1, TN_mat), lambda n, h, j: (0, j)),
            pl.BlockSpec((1, TN_mat), lambda n, h, j: (0, j)),
        ],
        out_specs=pl.BlockSpec((None, TH, Wo, TN_out), lambda n, h, j: (n, h, 0, j)),
        scratch_shapes=[pltpu.VMEM((M, Kc), compute_dtype)],
        compiler_params=pltpu.CompilerParams(
            # j (C2-tile) must stay sequential so the patch built at j==0 is reused.
            dimension_semantics=("parallel", "parallel", "arbitrary"),
            vmem_limit_bytes=vmem_limit),
        cost_estimate=cost,
    )(x_tiles, w2, scale, bias)

    # Interface conversion back to NCHW (strip C2 padding only when it exists).
    # TODO(synk): a channels-last consumer could take out[..., :C2] directly.
    if C2_out != C2:
        out = out[..., :C2]
    return out.transpose(0, 3, 1, 2)


def conv_reference(x, weight, gamma, beta, running_mean, running_var,
                   k=1, s=1, p=None, d=1, eps=1e-5):
    pad = autopad(k, p, d)
    y = jax.lax.conv_general_dilated(
        x, weight, window_strides=(s, s),
        padding=[(pad, pad), (pad, pad)],
        dimension_numbers=("NCHW", "OIHW", "NCHW"))
    scale = gamma / jnp.sqrt(running_var + eps)
    bias = beta - running_mean * scale
    y = y * scale[None, :, None, None] + bias[None, :, None, None]
    return y * jax.nn.sigmoid(y)


def _make_params(key, c1, c2, k):
    k_x, k_w, k_g, k_b, k_m, k_v = jax.random.split(key, 6)
    fan_in = c1 * k * k
    bound = 1.0 / math.sqrt(fan_in)
    weight = jax.random.uniform(k_w, (c2, c1, k, k), jnp.float32, -bound, bound)
    gamma = 1.0 + 0.1 * jax.random.normal(k_g, (c2,), jnp.float32)
    beta = 0.1 * jax.random.normal(k_b, (c2,), jnp.float32)
    mean = 0.1 * jax.random.normal(k_m, (c2,), jnp.float32)
    var = 1.0 + 0.1 * jax.random.uniform(k_v, (c2,), jnp.float32)
    return k_x, weight, gamma, beta, mean, var


if __name__ == "__main__":
    key = jax.random.PRNGKey(0)
    kA, kB, kC = jax.random.split(key, 3)

    # A) stem-like conv: small C1/C2, single spatial + channel tile (f32 and bf16 MXU).
    k_x, w, g, b, m, v = _make_params(kA, 4, 8, 3)
    x = jax.random.normal(k_x, (2, 4, 16, 16), jnp.float32)
    ref = conv_reference(x, w, g, b, m, v, k=3, s=1)
    out = jax.block_until_ready(conv_forward(x, w, g, b, m, v, k=3, s=1))
    assert out.shape == ref.shape, (out.shape, ref.shape)
    assert jnp.allclose(out, ref, atol=1e-4, rtol=1e-4), float(jnp.abs(out - ref).max())

    out_bf16 = jax.block_until_ready(
        conv_forward(x, w, g, b, m, v, k=3, s=1, compute_dtype=jnp.bfloat16))
    assert out_bf16.shape == ref.shape
    assert jnp.allclose(out_bf16, ref, atol=5e-2, rtol=5e-2), \
        float(jnp.abs(out_bf16 - ref).max())

    # B) exercises halo'ed spatial tiling (HT=2) + C2 tiling (JT=2) + patch reuse.
    k_x, w, g, b, m, v = _make_params(kB, 8, 256, 3)
    x = jax.random.normal(k_x, (1, 8, 16, 16), jnp.float32)
    ref = conv_reference(x, w, g, b, m, v, k=3, s=1)
    out = jax.block_until_ready(conv_forward(x, w, g, b, m, v, k=3, s=1, m_target=128))
    assert out.shape == ref.shape, (out.shape, ref.shape)
    assert jnp.allclose(out, ref, atol=1e-3, rtol=1e-3), float(jnp.abs(out - ref).max())

    # C) pointwise conv (module default k=1).
    k_x, w, g, b, m, v = _make_params(kC, 16, 32, 1)
    x = jax.random.normal(k_x, (1, 16, 8, 8), jnp.float32)
    ref = conv_reference(x, w, g, b, m, v, k=1, s=1)
    out = jax.block_until_ready(conv_forward(x, w, g, b, m, v, k=1, s=1))
    assert out.shape == ref.shape, (out.shape, ref.shape)
    assert jnp.allclose(out, ref, atol=1e-3, rtol=1e-3), float(jnp.abs(out - ref).max())

    print("KERNEL_OK")
</pallas_src>

<mosaic_0001>
module attributes {stable_mosaic.version = 11 : i64} {
  func.func @_conv_bn_silu_kernel(%arg0: i32, %arg1: i32, %arg2: i32, %arg3: memref<1x1x18x18x4xf32, #tpu.memory_space<vmem>>, %arg4: memref<36x128xf32, #tpu.memory_space<vmem>>, %arg5: memref<1x128xf32, #tpu.memory_space<vmem>>, %arg6: memref<1x128xf32, #tpu.memory_space<vmem>>, %arg7: memref<1x16x16x8xf32, #tpu.memory_space<vmem>>, %arg8: memref<256x36xf32, #tpu.memory_space<vmem>>) attributes {dimension_semantics = [#tpu.dimension_semantics<parallel>, #tpu.dimension_semantics<parallel>, #tpu.dimension_semantics<arbitrary>], iteration_bounds = array<i64: 2, 1, 1>, scalar_prefetch = 0 : i64, scratch_operands = 1 : i64, tpu.core_type = #tpu.core_type<tc>, window_params = [{transform_indices = @transform_0, window_bounds = array<i64: 1, 1, 18, 18, 4>}, {transform_indices = @transform_1, window_bounds = array<i64: 36, 128>}, {transform_indices = @transform_2, window_bounds = array<i64: 1, 128>}, {transform_indices = @transform_3, window_bounds = array<i64: 1, 128>}, {transform_indices = @transform_4, window_bounds = array<i64: 1, 16, 16, 8>}]} {
    %c0_i32 = arith.constant 0 : i32
    %0 = arith.cmpi eq, %arg2, %c0_i32 : i32
    %1 = arith.extui %0 : i1 to i32
    %c0_i32_0 = arith.constant 0 : i32
    %2 = arith.cmpi ne, %1, %c0_i32_0 : i32
    scf.if %2 {
      %c0_13 = arith.constant 0 : index
      %c0_14 = arith.constant 0 : index
      %c0_15 = arith.constant 0 : index
      %c0_16 = arith.constant 0 : index
      %c0_17 = arith.constant 0 : index
      %23 = vector.load %arg3[%c0_13, %c0_14, %c0_15, %c0_16, %c0_17] : memref<1x1x18x18x4xf32, #tpu.memory_space<vmem>>, vector<1x1x16x16x4xf32>
      %24 = vector.shape_cast %23 : vector<1x1x16x16x4xf32> to vector<16x16x4xf32>
      %25 = vector.shape_cast %24 : vector<16x16x4xf32> to vector<256x4xf32>
      %c0_18 = arith.constant 0 : index
      %c0_19 = arith.constant 0 : index
      %26 = vector.load %arg8[%c0_18, %c0_19] : memref<256x36xf32, #tpu.memory_space<vmem>>, vector<256x4xf32>
      tpu.vector_store %arg8[%c0_18, %c0_19], %25 {strides = array<i32>} : memref<256x36xf32, #tpu.memory_space<vmem>>, vector<256x4xf32>,
      %c0_20 = arith.constant 0 : index
      %c0_21 = arith.constant 0 : index
      %c0_22 = arith.constant 0 : index
      %c1 = arith.constant 1 : index
      %c0_23 = arith.constant 0 : index
      %27 = vector.load %arg3[%c0_20, %c0_21, %c0_22, %c1, %c0_23] : memref<1x1x18x18x4xf32, #tpu.memory_space<vmem>>, vector<1x1x16x16x4xf32>
      %28 = vector.shape_cast %27 : vector<1x1x16x16x4xf32> to vector<16x16x4xf32>
      %29 = vector.shape_cast %28 : vector<16x16x4xf32> to vector<256x4xf32>
      %c0_24 = arith.constant 0 : index
      %c4 = arith.constant 4 : index
      %30 = vector.load %arg8[%c0_24, %c4] : memref<256x36xf32, #tpu.memory_space<vmem>>, vector<256x4xf32>
      tpu.vector_store %arg8[%c0_24, %c4], %29 {strides = array<i32>} : memref<256x36xf32, #tpu.memory_space<vmem>>, vector<256x4xf32>,
      %c0_25 = arith.constant 0 : index
      %c0_26 = arith.constant 0 : index
      %c0_27 = arith.constant 0 : index
      %c2 = arith.constant 2 : index
      %c0_28 = arith.constant 0 : index
      %31 = vector.load %arg3[%c0_25, %c0_26, %c0_27, %c2, %c0_28] : memref<1x1x18x18x4xf32, #tpu.memory_space<vmem>>, vector<1x1x16x16x4xf32>
      %32 = vector.shape_cast %31 : vector<1x1x16x16x4xf32> to vector<16x16x4xf32>
      %33 = vector.shape_cast %32 : vector<16x16x4xf32> to vector<256x4xf32>
      %c0_29 = arith.constant 0 : index
      %c8 = arith.constant 8 : index
      %34 = vector.load %arg8[%c0_29, %c8] : memref<256x36xf32, #tpu.memory_space<vmem>>, vector<256x4xf32>
      tpu.vector_store %arg8[%c0_29, %c8], %33 {strides = array<i32>} : memref<256x36xf32, #tpu.memory_space<vmem>>, vector<256x4xf32>,
      %c0_30 = arith.constant 0 : index
      %c0_31 = arith.constant 0 : index
      %c1_32 = arith.constant 1 : index
      %c0_33 = arith.constant 0 : index
      %c0_34 = arith.constant 0 : index
      %35 = vector.load %arg3[%c0_30, %c0_31, %c1_32, %c0_33, %c0_34] : memref<1x1x18x18x4xf32, #tpu.memory_space<vmem>>, vector<1x1x16x16x4xf32>
      %36 = vector.shape_cast %35 : vector<1x1x16x16x4xf32> to vector<16x16x4xf32>
      %37 = vector.shape_cast %36 : vector<16x16x4xf32> to vector<256x4xf32>
      %c0_35 = arith.constant 0 : index
      %c12 = arith.constant 12 : index
      %38 = vector.load %arg8[%c0_35, %c12] : memref<256x36xf32, #tpu.memory_space<vmem>>, vector<256x4xf32>
      tpu.vector_store %arg8[%c0_35, %c12], %37 {strides = array<i32>} : memref<256x36xf32, #tpu.memory_space<vmem>>, vector<256x4xf32>,
      %c0_36 = arith.constant 0 : index
      %c0_37 = arith.constant 0 : index
      %c1_38 = arith.constant 1 : index
      %c1_39 = arith.constant 1 : index
      %c0_40 = arith.constant 0 : index
      %39 = vector.load %arg3[%c0_36, %c0_37, %c1_38, %c1_39, %c0_40] : memref<1x1x18x18x4xf32, #tpu.memory_space<vmem>>, vector<1x1x16x16x4xf32>
      %40 = vector.shape_cast %39 : vector<1x1x16x16x4xf32> to vector<16x16x4xf32>
      %41 = vector.shape_cast %40 : vector<16x16x4xf32> to vector<256x4xf32>
      %c0_41 = arith.constant 0 : index
      %c16 = arith.constant 16 : index
      %42 = vector.load %arg8[%c0_41, %c16] : memref<256x36xf32, #tpu.memory_space<vmem>>, vector<256x4xf32>
      tpu.vector_store %arg8[%c0_41, %c16], %41 {strides = array<i32>} : memref<256x36xf32, #tpu.memory_space<vmem>>, vector<256x4xf32>,
      %c0_42 = arith.constant 0 : index
      %c0_43 = arith.constant 0 : index
      %c1_44 = arith.constant 1 : index
      %c2_45 = arith.constant 2 : index
      %c0_46 = arith.constant 0 : index
      %43 = vector.load %arg3[%c0_42, %c0_43, %c1_44, %c2_45, %c0_46] : memref<1x1x18x18x4xf32, #tpu.memory_space<vmem>>, vector<1x1x16x16x4xf32>
      %44 = vector.shape_cast %43 : vector<1x1x16x16x4xf32> to vector<16x16x4xf32>
      %45 = vector.shape_cast %44 : vector<16x16x4xf32> to vector<256x4xf32>
      %c0_47 = arith.constant 0 : index
      %c20 = arith.constant 20 : index
      %46 = vector.load %arg8[%c0_47, %c20] : memref<256x36xf32, #tpu.memory_space<vmem>>, vector<256x4xf32>
      tpu.vector_store %arg8[%c0_47, %c20], %45 {strides = array<i32>} : memref<256x36xf32, #tpu.memory_space<vmem>>, vector<256x4xf32>,
      %c0_48 = arith.constant 0 : index
      %c0_49 = arith.constant 0 : index
      %c2_50 = arith.constant 2 : index
      %c0_51 = arith.constant 0 : index
      %c0_52 = arith.constant 0 : index
      %47 = vector.load %arg3[%c0_48, %c0_49, %c2_50, %c0_51, %c0_52] : memref<1x1x18x18x4xf32, #tpu.memory_space<vmem>>, vector<1x1x16x16x4xf32>
      %48 = vector.shape_cast %47 : vector<1x1x16x16x4xf32> to vector<16x16x4xf32>
      %49 = vector.shape_cast %48 : vector<16x16x4xf32> to vector<256x4xf32>
      %c0_53 = arith.constant 0 : index
      %c24 = arith.constant 24 : index
      %50 = vector.load %arg8[%c0_53, %c24] : memref<256x36xf32, #tpu.memory_space<vmem>>, vector<256x4xf32>
      tpu.vector_store %arg8[%c0_53, %c24], %49 {strides = array<i32>} : memref<256x36xf32, #tpu.memory_space<vmem>>, vector<256x4xf32>,
      %c0_54 = arith.constant 0 : index
      %c0_55 = arith.constant 0 : index
      %c2_56 = arith.constant 2 : index
      %c1_57 = arith.constant 1 : index
      %c0_58 = arith.constant 0 : index
      %51 = vector.load %arg3[%c0_54, %c0_55, %c2_56, %c1_57, %c0_58] : memref<1x1x18x18x4xf32, #tpu.memory_space<vmem>>, vector<1x1x16x16x4xf32>
      %52 = vector.shape_cast %51 : vector<1x1x16x16x4xf32> to vector<16x16x4xf32>
      %53 = vector.shape_cast %52 : vector<16x16x4xf32> to vector<256x4xf32>
      %c0_59 = arith.constant 0 : index
      %c28 = arith.constant 28 : index
      %54 = vector.load %arg8[%c0_59, %c28] : memref<256x36xf32, #tpu.memory_space<vmem>>, vector<256x4xf32>
      tpu.vector_store %arg8[%c0_59, %c28], %53 {strides = array<i32>} : memref<256x36xf32, #tpu.memory_space<vmem>>, vector<256x4xf32>,
      %c0_60 = arith.constant 0 : index
      %c0_61 = arith.constant 0 : index
      %c2_62 = arith.constant 2 : index
      %c2_63 = arith.constant 2 : index
      %c0_64 = arith.constant 0 : index
      %55 = vector.load %arg3[%c0_60, %c0_61, %c2_62, %c2_63, %c0_64] : memref<1x1x18x18x4xf32, #tpu.memory_space<vmem>>, vector<1x1x16x16x4xf32>
      %56 = vector.shape_cast %55 : vector<1x1x16x16x4xf32> to vector<16x16x4xf32>
      %57 = vector.shape_cast %56 : vector<16x16x4xf32> to vector<256x4xf32>
      %c0_65 = arith.constant 0 : index
      %c32 = arith.constant 32 : index
      %58 = vector.load %arg8[%c0_65, %c32] : memref<256x36xf32, #tpu.memory_space<vmem>>, vector<256x4xf32>
      tpu.vector_store %arg8[%c0_65, %c32], %57 {strides = array<i32>} : memref<256x36xf32, #tpu.memory_space<vmem>>, vector<256x4xf32>,
    } else {
    }
    %c0 = arith.constant 0 : index
    %c0_1 = arith.constant 0 : index
    %3 = vector.load %arg8[%c0, %c0_1] : memref<256x36xf32, #tpu.memory_space<vmem>>, vector<256x36xf32>
    %c0_2 = arith.constant 0 : index
    %c0_3 = arith.constant 0 : index
    %4 = vector.load %arg4[%c0_2, %c0_3] : memref<36x128xf32, #tpu.memory_space<vmem>>, vector<36x128xf32>
    %cst = arith.constant dense<0.000000e+00> : vector<256x128xf32>
    %5 = tpu.matmul %3, %4, %cst {dimension_numbers = #tpu.dot_dimension_numbers<[1], [0], [0], [1], [0, 0, 1, 1], [], []>} : vector<256x36xf32>, vector<36x128xf32>, vector<256x128xf32> -> vector<256x128xf32>
    %6 = vector.extract_strided_slice %5 {offsets = [0, 0], sizes = [256, 8], strides = [1, 1]} : vector<256x128xf32> to vector<256x8xf32>
    %c0_4 = arith.constant 0 : index
    %c0_5 = arith.constant 0 : index
    %7 = vector.load %arg5[%c0_4, %c0_5] : memref<1x128xf32, #tpu.memory_space<vmem>>, vector<1x8xf32>
    %8 = vector.broadcast %7 : vector<1x8xf32> to vector<256x8xf32>
    %9 = arith.mulf %6, %8 : vector<256x8xf32>
    %c0_6 = arith.constant 0 : index
    %c0_7 = arith.constant 0 : index
    %10 = vector.load %arg6[%c0_6, %c0_7] : memref<1x128xf32, #tpu.memory_space<vmem>>, vector<1x8xf32>
    %11 = vector.broadcast %10 : vector<1x8xf32> to vector<256x8xf32>
    %12 = arith.addf %9, %11 : vector<256x8xf32>
    %13 = arith.negf %12 : vector<256x8xf32>
    %14 = math.exp %13 : vector<256x8xf32>
    %cst_8 = arith.constant 1.000000e+00 : f32
    %15 = vector.broadcast %cst_8 : f32 to vector<256x8xf32>
    %16 = arith.addf %15, %14 : vector<256x8xf32>
    %17 = arith.divf %15, %16 : vector<256x8xf32>
    %18 = arith.mulf %12, %17 : vector<256x8xf32>
    %19 = vector.shape_cast %18 : vector<256x8xf32> to vector<16x16x8xf32>
    %c0_9 = arith.constant 0 : index
    %c0_10 = arith.constant 0 : index
    %c0_11 = arith.constant 0 : index
    %c0_12 = arith.constant 0 : index
    %20 = vector.load %arg7[%c0_9, %c0_10, %c0_11, %c0_12] : memref<1x16x16x8xf32, #tpu.memory_space<vmem>>, vector<1x16x16x8xf32>
    %21 = vector.shape_cast %20 : vector<1x16x16x8xf32> to vector<16x16x8xf32>
    %22 = vector.shape_cast %19 : vector<16x16x8xf32> to vector<1x16x16x8xf32>
    tpu.vector_store %arg7[%c0_9, %c0_10, %c0_11, %c0_12], %22 {strides = array<i32>} : memref<1x16x16x8xf32, #tpu.memory_space<vmem>>, vector<1x16x16x8xf32>,
    return
  }
  func.func @transform_0(%arg0: i32, %arg1: i32, %arg2: i32) -> (i32, i32, i32, i32, i32) {
    %c0_i32 = arith.constant 0 : i32
    %c0_i32_0 = arith.constant 0 : i32
    %c0_i32_1 = arith.constant 0 : i32
    %c0_i32_2 = arith.constant 0 : i32
    return %arg0, %arg1, %c0_i32, %c0_i32_0, %c0_i32_1 : i32, i32, i32, i32, i32
  }
  func.func @transform_1(%arg0: i32, %arg1: i32, %arg2: i32) -> (i32, i32) {
    %c0_i32 = arith.constant 0 : i32
    %c0_i32_0 = arith.constant 0 : i32
    return %c0_i32, %arg2 : i32, i32
  }
  func.func @transform_2(%arg0: i32, %arg1: i32, %arg2: i32) -> (i32, i32) {
    %c0_i32 = arith.constant 0 : i32
    %c0_i32_0 = arith.constant 0 : i32
    return %c0_i32, %arg2 : i32, i32
  }
  func.func @transform_3(%arg0: i32, %arg1: i32, %arg2: i32) -> (i32, i32) {
    %c0_i32 = arith.constant 0 : i32
    %c0_i32_0 = arith.constant 0 : i32
    return %c0_i32, %arg2 : i32, i32
  }
  func.func @transform_4(%arg0: i32, %arg1: i32, %arg2: i32) -> (i32, i32, i32, i32) {
    %c0_i32 = arith.constant 0 : i32
    %c0_i32_0 = arith.constant 0 : i32
    return %arg0, %arg1, %c0_i32, %arg2 : i32, i32, i32, i32
  }
}

</mosaic_0001>

<llo_original>
// kernel: tpu_custom_call.1
$region0: #{tpu_custom_call.1}
  #allocation0 [shape = 'u32[]', space=smem, size = 0x4, offset = 0x4, fixed_abs, tag = 'smem constant byte address 0x4 - core index']
  #allocation1 [shape = 'u32[144,128]{1,0:T(1,128)}', space=vmem, size = 0x12000, scoped, tag = 'internal scratch']
  #allocation2 [shape = 'f32[256,36]{1,0:T(8,128)}', space=vmem, size = 0x20000, scoped, tag = 'scratch operand']
  %s0 = inlined_call_operand.vmem [shape: f32[2,1,18,18,4], index: 0, kind: input, shape index: {}]
  %s1 = inlined_call_operand.vmem [shape: f32[36,128], index: 1, kind: input, shape index: {}]
  %s2 = inlined_call_operand.vmem [shape: f32[1,128], index: 2, kind: input, shape index: {}]
  %s3 = inlined_call_operand.vmem [shape: f32[1,128], index: 3, kind: input, shape index: {}]
  %s4 = inlined_call_operand.vmem [shape: f32[2,16,16,8], index: 4, kind: output, shape index: {}]
  %s5 = sld [smem:[#allocation0]]
  $region53: #{tpu_custom_call.1} parent=0
    _
  %s7 = ssub.s32 1, %s5
  %s8 = scalar_select 0, %s7, %s5
  loop: start=0, step=1, limit=4
  $region2: #{tpu_custom_call.1} parent=0 // loop_pre_header
    _
  $region3: #{tpu_custom_call.1} parent=0 // loop_header
    %s10 = sphi 0, %s14
    %p11 = scmp.ge.s32.totalorder %s10, 4
    %s17 = sphi 0, %s36
    %s18 = sphi 0, %s32
    %s19 = sphi 0, %s28
    %s20 = sphi 0, %s17
    %s21 = sphi 0, %s18
    %s22 = sphi 0, %s19
    %s23 = sphi 0, %s20
    %s24 = sphi 0, %s21
    %s25 = sphi 0, %s22
    %s41 = sphi 0, %s43
    %s44 = sphi 0, %s41
    %s45 = sphi 0, %s44
    %s61 = sphi 0, %s45
    %s67 = sphi 0, %s69
    %s70 = sphi 0, %s67
    %s71 = sphi 0, %s70
    %s87 = sphi 0, %s71
    %s93 = sphi 0, %s95
    %s96 = sphi 0, %s93
    %s97 = sphi 0, %s96
    %s113 = sphi 0, %s97
    %s119 = sphi 0, %s121
    %s122 = sphi 0, %s119
    %s123 = sphi 0, %s122
    %s139 = sphi 0, %s123
    %s149 = sphi 0, %s151
    %s152 = sphi 0, %s149
    %s153 = sphi 0, %s152
    %s169 = sphi 0, %s153
  $region4: #{tpu_custom_call.1} parent=0 // loop_header_branch
    %13 = sbr.rel (%p11) target = $region8
  $region5: #{tpu_custom_call.1} parent=0 // loop_body
    %s15 = ssub.s32 %s10, 1
    %s16 = ssub.s32 %s10, 2
    %s26 = sadd.s32 1, %s19
    %p27 = scmp.ge.s32.totalorder %s26, 1
    %s28 = scalar_select %p27, 0, %s26
    %s29 = sadd.s32 1, %s18
    %s30 = scalar_select %p27, %s29, %s18
    %p31 = scmp.ge.s32.totalorder %s30, 1
    %s32 = scalar_select %p31, 0, %s30
    %s33 = sadd.s32 1, %s17
    %s34 = scalar_select %p31, %s33, %s17
    %p35 = scmp.ge.s32.totalorder %s34, 2
    %s36 = scalar_select %p35, 0, %s34
    %s37 = ssub.s32 %s17, %s36
    %s38 = ssub.s32 %s18, %s32
    %s39 = sor.u32 %s37, %s38
    %p40 = scmp.eq.s32.totalorder %s39, 0
    %s42 = sadd.s32 %s41, 1
    %s43 = scalar_select %p40, %s41, %s42
    %p46 = pneg %p40
    %p47 = scmp.eq.s32.totalorder %s10, 1
    %p48 = por %p46, %p47
    %p49 = scmp.ne.s32.totalorder %s41, %s44
    %p50 = scmp.eq.s32.totalorder %s10, 0
    %p51 = por %p49, %p50
    %p52 = scmp.ne.s32.totalorder %s41, %s44
    %p53 = scmp.eq.s32.totalorder %s15, 1
    %p54 = por %p52, %p53
    %p55 = scmp.ne.s32.totalorder %s44, %s45
    %p56 = scmp.eq.s32.totalorder %s15, 0
    %p57 = por %p55, %p56
    %p58 = scmp.ne.s32.totalorder %s44, %s45
    %p59 = scmp.eq.s32.totalorder %s16, 1
    %p60 = por %p58, %p59
    %p62 = scmp.ne.s32.totalorder %s45, %s61
    %p63 = scmp.eq.s32.totalorder %s16, 0
    %p64 = por %p62, %p63
    %s65 = ssub.s32 %s19, %s28
    %p66 = scmp.eq.s32.totalorder %s65, 0
    %s68 = sadd.s32 %s67, 1
    %s69 = scalar_select %p66, %s67, %s68
    %p72 = pneg %p66
    %p73 = scmp.eq.s32.totalorder %s10, 1
    %p74 = por %p72, %p73
    %p75 = scmp.ne.s32.totalorder %s67, %s70
    %p76 = scmp.eq.s32.totalorder %s10, 0
    %p77 = por %p75, %p76
    %p78 = scmp.ne.s32.totalorder %s67, %s70
    %p79 = scmp.eq.s32.totalorder %s15, 1
    %p80 = por %p78, %p79
    %p81 = scmp.ne.s32.totalorder %s70, %s71
    %p82 = scmp.eq.s32.totalorder %s15, 0
    %p83 = por %p81, %p82
    %p84 = scmp.ne.s32.totalorder %s70, %s71
    %p85 = scmp.eq.s32.totalorder %s16, 1
    %p86 = por %p84, %p85
    %p88 = scmp.ne.s32.totalorder %s71, %s87
    %p89 = scmp.eq.s32.totalorder %s16, 0
    %p90 = por %p88, %p89
    %s91 = ssub.s32 %s19, %s28
    %p92 = scmp.eq.s32.totalorder %s91, 0
    %s94 = sadd.s32 %s93, 1
    %s95 = scalar_select %p92, %s93, %s94
    %p98 = pneg %p92
    %p99 = scmp.eq.s32.totalorder %s10, 1
    %p100 = por %p98, %p99
    %p101 = scmp.ne.s32.totalorder %s93, %s96
    %p102 = scmp.eq.s32.totalorder %s10, 0
    %p103 = por %p101, %p102
    %p104 = scmp.ne.s32.totalorder %s93, %s96
    %p105 = scmp.eq.s32.totalorder %s15, 1
    %p106 = por %p104, %p105
    %p107 = scmp.ne.s32.totalorder %s96, %s97
    %p108 = scmp.eq.s32.totalorder %s15, 0
    %p109 = por %p107, %p108
    %p110 = scmp.ne.s32.totalorder %s96, %s97
    %p111 = scmp.eq.s32.totalorder %s16, 1
    %p112 = por %p110, %p111
    %p114 = scmp.ne.s32.totalorder %s97, %s113
    %p115 = scmp.eq.s32.totalorder %s16, 0
    %p116 = por %p114, %p115
    %s117 = ssub.s32 %s19, %s28
    %p118 = scmp.eq.s32.totalorder %s117, 0
    %s120 = sadd.s32 %s119, 1
    %s121 = scalar_select %p118, %s119, %s120
    %p124 = pneg %p118
    %p125 = scmp.eq.s32.totalorder %s10, 1
    %p126 = por %p124, %p125
    %p127 = scmp.ne.s32.totalorder %s119, %s122
    %p128 = scmp.eq.s32.totalorder %s10, 0
    %p129 = por %p127, %p128
    %p130 = scmp.ne.s32.totalorder %s119, %s122
    %p131 = scmp.eq.s32.totalorder %s15, 1
    %p132 = por %p130, %p131
    %p133 = scmp.ne.s32.totalorder %s122, %s123
    %p134 = scmp.eq.s32.totalorder %s15, 0
    %p135 = por %p133, %p134
    %p136 = scmp.ne.s32.totalorder %s122, %s123
    %p137 = scmp.eq.s32.totalorder %s16, 1
    %p138 = por %p136, %p137
    %p140 = scmp.ne.s32.totalorder %s123, %s139
    %p141 = scmp.eq.s32.totalorder %s16, 0
    %p142 = por %p140, %p141
    %s143 = ssub.s32 %s17, %s36
    %s144 = ssub.s32 %s18, %s32
    %s145 = sor.u32 %s143, %s144
    %s146 = ssub.s32 %s19, %s28
    %s147 = sor.u32 %s145, %s146
    %p148 = scmp.eq.s32.totalorder %s147, 0
    %s150 = sadd.s32 %s149, 1
    %s151 = scalar_select %p148, %s149, %s150
    %p154 = pneg %p148
    %p155 = scmp.eq.s32.totalorder %s10, 1
    %p156 = por %p154, %p155
    %p157 = scmp.ne.s32.totalorder %s149, %s152
    %p158 = scmp.eq.s32.totalorder %s10, 0
    %p159 = por %p157, %p158
    %p160 = scmp.ne.s32.totalorder %s149, %s152
    %p161 = scmp.eq.s32.totalorder %s15, 1
    %p162 = por %p160, %p161
    %p163 = scmp.ne.s32.totalorder %s152, %s153
    %p164 = scmp.eq.s32.totalorder %s15, 0
    %p165 = por %p163, %p164
    %p166 = scmp.ne.s32.totalorder %s152, %s153
    %p167 = scmp.eq.s32.totalorder %s16, 1
    %p168 = por %p166, %p167
    %p170 = scmp.ne.s32.totalorder %s153, %s169
    %p171 = scmp.eq.s32.totalorder %s16, 0
    %p172 = por %p170, %p171
    %p173 = scmp.le.s32.totalorder 1, %s10
    %p174 = scmp.lt.s32.totalorder %s10, 3
    %p175 = pnand %p173, %p174
    %p176 = pneg %p175
    // Predicated region
    $region9: #{tpu_custom_call.1} parent=5 // pred_check
      _
    $region10: #{tpu_custom_call.1} parent=5 // pred_check_branch
      %178 = sbr.rel (%p175) target = $region12
    $region11: #{tpu_custom_call.1} parent=5 // pred_region
      %s179 = ssub.s32 %s10, 1
      // Predicated region
      $region13: #{tpu_custom_call.1} parent=11 // pred_check
        %p180 = pneg %p83
      $region14: #{tpu_custom_call.1} parent=11 // pred_check_branch
        %182 = sbr.rel (%p180) target = $region16
      $region15: #{tpu_custom_call.1} parent=11 // pred_region
        %p183 = scmp.lt.s32.totalorder %s22, 0
        %s184 = scalar_select %p183, %s22, 0
        %s185 = smul.addr %s184, 8
        %s186 = scalar_lea.vmem %s1, %s185
      $region16: #{tpu_custom_call.1} parent=11 // pred_fallthru
        _
      // Predicated region
      $region17: #{tpu_custom_call.1} parent=11 // pred_check
        %p187 = pneg %p109
      $region18: #{tpu_custom_call.1} parent=11 // pred_check_branch
        %189 = sbr.rel (%p187) target = $region20
      $region19: #{tpu_custom_call.1} parent=11 // pred_region
        %p190 = scmp.lt.s32.totalorder %s22, 0
        %s191 = scalar_select %p190, %s22, 0
        %s192 = scalar_lea.vmem %s2, %s191
      $region20: #{tpu_custom_call.1} parent=11 // pred_fallthru
        _
      // Predicated region
      $region21: #{tpu_custom_call.1} parent=11 // pred_check
        %p193 = pneg %p135
      $region22: #{tpu_custom_call.1} parent=11 // pred_check_branch
        %195 = sbr.rel (%p193) target = $region24
      $region23: #{tpu_custom_call.1} parent=11 // pred_region
        %p196 = scmp.lt.s32.totalorder %s22, 0
        %s197 = scalar_select %p196, %s22, 0
        %s198 = scalar_lea.vmem %s3, %s197
      $region24: #{tpu_custom_call.1} parent=11 // pred_fallthru
        _
    $region12: #{tpu_custom_call.1} parent=5 // pred_fallthru
      _
    %p199 = scmp.lt.s32.totalorder %s10, 2
    // Predicated region
    $region25: #{tpu_custom_call.1} parent=5 // pred_check
      %p200 = pneg %p199
    $region26: #{tpu_custom_call.1} parent=5 // pred_check_branch
      %202 = sbr.rel (%p200) target = $region28
    $region27: #{tpu_custom_call.1} parent=5 // pred_region
      // Predicated region
      $region29: #{tpu_custom_call.1} parent=27 // pred_check
        %p203 = pneg %p51
      $region30: #{tpu_custom_call.1} parent=27 // pred_check_branch
        %205 = sbr.rel (%p203) target = $region32
      $region31: #{tpu_custom_call.1} parent=27 // pred_region
        %p206 = scmp.lt.s32.totalorder %s17, 1
        %s207 = scalar_select %p206, %s17, 1
        %p208 = scmp.lt.s32.totalorder %s18, 0
        %s209 = scalar_select %p208, %s18, 0
        %s210 = smul.addr %s209, 54
        %s211 = smul.addr %s207, 54
        %s212 = sadd.s32 %s210, %s211
        %s213 = smul.addr %s212, 8
        %s214 = scalar_lea.vmem %s0, %s213
      $region32: #{tpu_custom_call.1} parent=27 // pred_fallthru
        _
    $region28: #{tpu_custom_call.1} parent=5 // pred_fallthru
      _
    %p215 = scmp.le.s32.totalorder 1, %s10
    %p216 = scmp.lt.s32.totalorder %s10, 3
    %p217 = pnand %p215, %p216
    %p218 = pneg %p217
    // Predicated region
    $region33: #{tpu_custom_call.1} parent=5 // pred_check
      _
    $region34: #{tpu_custom_call.1} parent=5 // pred_check_branch
      %220 = sbr.rel (%p217) target = $region36
    $region35: #{tpu_custom_call.1} parent=5 // pred_region
      %s221 = ssub.s32 %s10, 1
      %p222 = scmp.lt.s32.totalorder %s20, 1
      %s223 = scalar_select %p222, %s20, 1
      %p224 = scmp.lt.s32.totalorder %s21, 0
      %s225 = scalar_select %p224, %s21, 0
      %s226 = smul.addr %s225, 54
      %s227 = smul.addr %s223, 54
      %s228 = sadd.s32 %s226, %s227
      %s229 = smul.addr %s228, 8
      %s230 = scalar_lea.vmem %s0, %s229
      %p231 = pneg %p57
      %p232 = pneg %p54
      %p233 = scmp.lt.s32.totalorder %s22, 0
      %s234 = scalar_select %p233, %s22, 0
      %s235 = smul.addr %s234, 8
      %s236 = scalar_lea.vmem %s1, %s235
      %p237 = pneg %p83
      %p238 = pneg %p80
      %p239 = scmp.lt.s32.totalorder %s22, 0
      %s240 = scalar_select %p239, %s22, 0
      %s241 = scalar_lea.vmem %s2, %s240
      %p242 = pneg %p109
      %p243 = pneg %p106
      %p244 = scmp.lt.s32.totalorder %s22, 0
      %s245 = scalar_select %p244, %s22, 0
      %s246 = scalar_lea.vmem %s3, %s245
      %p247 = pneg %p135
      %p248 = pneg %p132
      %p249 = pneg %p165
      %p250 = pneg %p162
      %s251 = smul.u32 16, %s21
      %p252 = scmp.lt.s32.totalorder %s20, 1
      %s253 = scalar_select %p252, %s20, 1
      %p254 = scmp.lt.s32.totalorder %s251, 15
      %s255 = scalar_select %p254, %s251, 15
      %p256 = scmp.lt.s32.totalorder %s22, 0
      %s257 = scalar_select %p256, %s22, 0
      %s258 = smul.addr %s255, 2
      %s259 = sadd.s32 %s257, %s258
      %s260 = smul.addr %s253, 32
      %s261 = sadd.s32 %s259, %s260
      %s262 = smul.addr %s261, 8
      %s263 = scalar_lea.vmem %s4, %s262
      %p264 = scmp.lt.s32.totalorder %s20, 1
      %s265 = scalar_select %p264, %s20, 1
      %p266 = scmp.lt.s32.totalorder %s21, 0
      %s267 = scalar_select %p266, %s21, 0
      %s268 = smul.addr %s267, 54
      %s269 = smul.addr %s265, 54
      %s270 = sadd.s32 %s268, %s269
      %s271 = smul.addr %s270, 8
      %s272 = scalar_lea.vmem %s0, %s271
      %p273 = scmp.lt.s32.totalorder %s22, 0
      %s274 = scalar_select %p273, %s22, 0
      %s275 = smul.addr %s274, 8
      %s276 = scalar_lea.vmem %s1, %s275
      %p277 = scmp.lt.s32.totalorder %s22, 0
      %s278 = scalar_select %p277, %s22, 0
      %s279 = scalar_lea.vmem %s2, %s278
      %p280 = scmp.lt.s32.totalorder %s22, 0
      %s281 = scalar_select %p280, %s22, 0
      %s282 = scalar_lea.vmem %s3, %s281
      %s283 = smul.u32 16, %s21
      %p284 = scmp.lt.s32.totalorder %s20, 1
      %s285 = scalar_select %p284, %s20, 1
      %p286 = scmp.lt.s32.totalorder %s283, 15
      %s287 = scalar_select %p286, %s283, 15
      %p288 = scmp.lt.s32.totalorder %s22, 0
      %s289 = scalar_select %p288, %s22, 0
      %s290 = smul.addr %s287, 2
      %s291 = sadd.s32 %s289, %s290
      %s292 = smul.addr %s285, 32
      %s293 = sadd.s32 %s291, %s292
      %s294 = smul.addr %s293, 8
      %s295 = scalar_lea.vmem %s4, %s294
      %s296 = smul.u32 16, %s21
      %p297 = scmp.eq.s32.totalorder %s22, 0
      // Predicated region
      $region37: #{tpu_custom_call.1} parent=35 // pred_check
        %p298 = pneg %p297
      $region38: #{tpu_custom_call.1} parent=35 // pred_check_branch
        %300 = sbr.rel (%p298) target = $region40
      $region39: #{tpu_custom_call.1} parent=35 // pred_region
        %v301 = vld [vmem:[%s272] sm:$0xff]
        %v302 = vld [vmem:[%s272 + $0x8] sm:$0xff]
        %v303 = vld [vmem:[%s272 + $0x18] sm:$0xff]
        %v304 = vld [vmem:[%s272 + $0x20] sm:$0xff]
        %v305 = vld [vmem:[%s272 + $0x30] sm:$0xff]
        %v306 = vld [vmem:[%s272 + $0x38] sm:$0xff]
        %v307 = vld [vmem:[%s272 + $0x48] sm:$0xff]
        %v308 = vld [vmem:[%s272 + $0x50] sm:$0xff]
        %v309 = vld [vmem:[%s272 + $0x60] sm:$0xff]
        %v310 = vld [vmem:[%s272 + $0x68] sm:$0xff]
        %v311 = vld [vmem:[%s272 + $0x78] sm:$0xff]
        %v312 = vld [vmem:[%s272 + $0x80] sm:$0xff]
        %v313 = vld [vmem:[%s272 + $0x90] sm:$0xff]
        %v314 = vld [vmem:[%s272 + $0x98] sm:$0xff]
        %v315 = vld [vmem:[%s272 + $0xa8] sm:$0xff]
        %v316 = vld [vmem:[%s272 + $0xb0] sm:$0xff]
        %v317 = vld [vmem:[%s272 + $0xc0] sm:$0xff]
        %v318 = vld [vmem:[%s272 + $0xc8] sm:$0xff]
        %v319 = vld [vmem:[%s272 + $0xd8] sm:$0xff]
        %v320 = vld [vmem:[%s272 + $0xe0] sm:$0xff]
        %v321 = vld [vmem:[%s272 + $0xf0] sm:$0xff]
        %v322 = vld [vmem:[%s272 + $0xf8] sm:$0xff]
        %v323 = vld [vmem:[%s272 + $0x108] sm:$0xff]
        %v324 = vld [vmem:[%s272 + $0x110] sm:$0xff]
        %v325 = vld [vmem:[%s272 + $0x120] sm:$0xff]
        %v326 = vld [vmem:[%s272 + $0x128] sm:$0xff]
        %v327 = vld [vmem:[%s272 + $0x138] sm:$0xff]
        %v328 = vld [vmem:[%s272 + $0x140] sm:$0xff]
        %v329 = vld [vmem:[%s272 + $0x150] sm:$0xff]
        %v330 = vld [vmem:[%s272 + $0x158] sm:$0xff]
        %v331 = vld [vmem:[%s272 + $0x168] sm:$0xff]
        %v332 = vld [vmem:[%s272 + $0x170] sm:$0xff]
        %vm333 = vcmask 31744
        %334 = vst.msk [vmem:[#allocation2] sm:$0xff] %vm333, %v301
        %335 = vst.msk [vmem:[#allocation2 + $0x8] sm:$0xff] %vm333, %v302
        %336 = vst.msk [vmem:[#allocation2 + $0x10] sm:$0xff] %vm333, %v303
        %337 = vst.msk [vmem:[#allocation2 + $0x18] sm:$0xff] %vm333, %v304
        %338 = vst.msk [vmem:[#allocation2 + $0x20] sm:$0xff] %vm333, %v305
        %339 = vst.msk [vmem:[#allocation2 + $0x28] sm:$0xff] %vm333, %v306
        %340 = vst.msk [vmem:[#allocation2 + $0x30] sm:$0xff] %vm333, %v307
        %341 = vst.msk [vmem:[#allocation2 + $0x38] sm:$0xff] %vm333, %v308
        %342 = vst.msk [vmem:[#allocation2 + $0x40] sm:$0xff] %vm333, %v309
        %343 = vst.msk [vmem:[#allocation2 + $0x48] sm:$0xff] %vm333, %v310
        %344 = vst.msk [vmem:[#allocation2 + $0x50] sm:$0xff] %vm333, %v311
        %345 = vst.msk [vmem:[#allocation2 + $0x58] sm:$0xff] %vm333, %v312
        %346 = vst.msk [vmem:[#allocation2 + $0x60] sm:$0xff] %vm333, %v313
        %347 = vst.msk [vmem:[#allocation2 + $0x68] sm:$0xff] %vm333, %v314
        %348 = vst.msk [vmem:[#allocation2 + $0x70] sm:$0xff] %vm333, %v315
        %349 = vst.msk [vmem:[#allocation2 + $0x78] sm:$0xff] %vm333, %v316
        %350 = vst.msk [vmem:[#allocation2 + $0x80] sm:$0xff] %vm333, %v317
        %351 = vst.msk [vmem:[#allocation2 + $0x88] sm:$0xff] %vm333, %v318
        %352 = vst.msk [vmem:[#allocation2 + $0x90] sm:$0xff] %vm333, %v319
        %353 = vst.msk [vmem:[#allocation2 + $0x98] sm:$0xff] %vm333, %v320
        %354 = vst.msk [vmem:[#allocation2 + $0xa0] sm:$0xff] %vm333, %v321
        %355 = vst.msk [vmem:[#allocation2 + $0xa8] sm:$0xff] %vm333, %v322
        %356 = vst.msk [vmem:[#allocation2 + $0xb0] sm:$0xff] %vm333, %v323
        %357 = vst.msk [vmem:[#allocation2 + $0xb8] sm:$0xff] %vm333, %v324
        %358 = vst.msk [vmem:[#allocation2 + $0xc0] sm:$0xff] %vm333, %v325
        %359 = vst.msk [vmem:[#allocation2 + $0xc8] sm:$0xff] %vm333, %v326
        %360 = vst.msk [vmem:[#allocation2 + $0xd0] sm:$0xff] %vm333, %v327
        %361 = vst.msk [vmem:[#allocation2 + $0xd8] sm:$0xff] %vm333, %v328
        %362 = vst.msk [vmem:[#allocation2 + $0xe0] sm:$0xff] %vm333, %v329
        %363 = vst.msk [vmem:[#allocation2 + $0xe8] sm:$0xff] %vm333, %v330
        %364 = vst.msk [vmem:[#allocation2 + $0xf0] sm:$0xff] %vm333, %v331
        %365 = vst.msk [vmem:[#allocation2 + $0xf8] sm:$0xff] %vm333, %v332
        %v366 = vld [vmem:[%s272 + $0x1] sm:$0xff]
        %v367 = vld [vmem:[%s272 + $0x9] sm:$0xff]
        %v368 = vld [vmem:[%s272 + $0x19] sm:$0xff]
        %v369 = vld [vmem:[%s272 + $0x21] sm:$0xff]
        %v370 = vld [vmem:[%s272 + $0x31] sm:$0xff]
        %v371 = vld [vmem:[%s272 + $0x39] sm:$0xff]
        %v372 = vld [vmem:[%s272 + $0x49] sm:$0xff]
        %v373 = vld [vmem:[%s272 + $0x51] sm:$0xff]
        %v374 = vld [vmem:[%s272 + $0x61] sm:$0xff]
        %v375 = vld [vmem:[%s272 + $0x69] sm:$0xff]
        %v376 = vld [vmem:[%s272 + $0x79] sm:$0xff]
        %v377 = vld [vmem:[%s272 + $0x81] sm:$0xff]
        %v378 = vld [vmem:[%s272 + $0x91] sm:$0xff]
        %v379 = vld [vmem:[%s272 + $0x99] sm:$0xff]
        %v380 = vld [vmem:[%s272 + $0xa9] sm:$0xff]
        %v381 = vld [vmem:[%s272 + $0xb1] sm:$0xff]
        %v382 = vld [vmem:[%s272 + $0xc1] sm:$0xff]
        %v383 = vld [vmem:[%s272 + $0xc9] sm:$0xff]
        %v384 = vld [vmem:[%s272 + $0xd9] sm:$0xff]
        %v385 = vld [vmem:[%s272 + $0xe1] sm:$0xff]
        %v386 = vld [vmem:[%s272 + $0xf1] sm:$0xff]
        %v387 = vld [vmem:[%s272 + $0xf9] sm:$0xff]
        %v388 = vld [vmem:[%s272 + $0x109] sm:$0xff]
        %v389 = vld [vmem:[%s272 + $0x111] sm:$0xff]
        %v390 = vld [vmem:[%s272 + $0x121] sm:$0xff]
        %v391 = vld [vmem:[%s272 + $0x129] sm:$0xff]
        %v392 = vld [vmem:[%s272 + $0x139] sm:$0xff]
        %v393 = vld [vmem:[%s272 + $0x141] sm:$0xff]
        %v394 = vld [vmem:[%s272 + $0x151] sm:$0xff]
        %v395 = vld [vmem:[%s272 + $0x159] sm:$0xff]
        %v396 = vld [vmem:[%s272 + $0x169] sm:$0xff]
        %v397 = vld [vmem:[%s272 + $0x171] sm:$0xff]
        %430 = vrot.lane.b32.xlu0 %v366, 4
        %v431 = vpop.permute.xlu0 %430
        %432 = vrot.lane.b32.xlu0 %v367, 4
        %v433 = vpop.permute.xlu0 %432
        %434 = vrot.lane.b32.xlu0 %v368, 4
        %v435 = vpop.permute.xlu0 %434
        %436 = vrot.lane.b32.xlu0 %v369, 4
        %v437 = vpop.permute.xlu0 %436
        %438 = vrot.lane.b32.xlu0 %v370, 4
        %v439 = vpop.permute.xlu0 %438
        %440 = vrot.lane.b32.xlu0 %v371, 4
        %v441 = vpop.permute.xlu0 %440
        %442 = vrot.lane.b32.xlu0 %v372, 4
        %v443 = vpop.permute.xlu0 %442
        %444 = vrot.lane.b32.xlu0 %v373, 4
        %v445 = vpop.permute.xlu0 %444
        %446 = vrot.lane.b32.xlu0 %v374, 4
        %v447 = vpop.permute.xlu0 %446
        %448 = vrot.lane.b32.xlu0 %v375, 4
        %v449 = vpop.permute.xlu0 %448
        %450 = vrot.lane.b32.xlu0 %v376, 4
        %v451 = vpop.permute.xlu0 %450
        %452 = vrot.lane.b32.xlu0 %v377, 4
        %v453 = vpop.permute.xlu0 %452
        %454 = vrot.lane.b32.xlu0 %v378, 4
        %v455 = vpop.permute.xlu0 %454
        %456 = vrot.lane.b32.xlu0 %v379, 4
        %v457 = vpop.permute.xlu0 %456
        %458 = vrot.lane.b32.xlu0 %v380, 4
        %v459 = vpop.permute.xlu0 %458
        %460 = vrot.lane.b32.xlu0 %v381, 4
        %v461 = vpop.permute.xlu0 %460
        %462 = vrot.lane.b32.xlu0 %v382, 4
        %v463 = vpop.permute.xlu0 %462
        %464 = vrot.lane.b32.xlu0 %v383, 4
        %v465 = vpop.permute.xlu0 %464
        %466 = vrot.lane.b32.xlu0 %v384, 4
        %v467 = vpop.permute.xlu0 %466
        %468 = vrot.lane.b32.xlu0 %v385, 4
        %v469 = vpop.permute.xlu0 %468
        %470 = vrot.lane.b32.xlu0 %v386, 4
        %v471 = vpop.permute.xlu0 %470
        %472 = vrot.lane.b32.xlu0 %v387, 4
        %v473 = vpop.permute.xlu0 %472
        %474 = vrot.lane.b32.xlu0 %v388, 4
        %v475 = vpop.permute.xlu0 %474
        %476 = vrot.lane.b32.xlu0 %v389, 4
        %v477 = vpop.permute.xlu0 %476
        %478 = vrot.lane.b32.xlu0 %v390, 4
        %v479 = vpop.permute.xlu0 %478
        %480 = vrot.lane.b32.xlu0 %v391, 4
        %v481 = vpop.permute.xlu0 %480
        %482 = vrot.lane.b32.xlu0 %v392, 4
        %v483 = vpop.permute.xlu0 %482
        %484 = vrot.lane.b32.xlu0 %v393, 4
        %v485 = vpop.permute.xlu0 %484
        %486 = vrot.lane.b32.xlu0 %v394, 4
        %v487 = vpop.permute.xlu0 %486
        %488 = vrot.lane.b32.xlu0 %v395, 4
        %v489 = vpop.permute.xlu0 %488
        %490 = vrot.lane.b32.xlu0 %v396, 4
        %v491 = vpop.permute.xlu0 %490
        %492 = vrot.lane.b32.xlu0 %v397, 4
        %v493 = vpop.permute.xlu0 %492
        %vm526 = vcmask 64544
        %527 = vst.msk [vmem:[#allocation2] sm:$0xff] %vm526, %v431
        %528 = vst.msk [vmem:[#allocation2 + $0x8] sm:$0xff] %vm526, %v433
        %529 = vst.msk [vmem:[#allocation2 + $0x10] sm:$0xff] %vm526, %v435
        %530 = vst.msk [vmem:[#allocation2 + $0x18] sm:$0xff] %vm526, %v437
        %531 = vst.msk [vmem:[#allocation2 + $0x20] sm:$0xff] %vm526, %v439
        %532 = vst.msk [vmem:[#allocation2 + $0x28] sm:$0xff] %vm526, %v441
        %533 = vst.msk [vmem:[#allocation2 + $0x30] sm:$0xff] %vm526, %v443
        %534 = vst.msk [vmem:[#allocation2 + $0x38] sm:$0xff] %vm526, %v445
        %535 = vst.msk [vmem:[#allocation2 + $0x40] sm:$0xff] %vm526, %v447
        %536 = vst.msk [vmem:[#allocation2 + $0x48] sm:$0xff] %vm526, %v449
        %537 = vst.msk [vmem:[#allocation2 + $0x50] sm:$0xff] %vm526, %v451
        %538 = vst.msk [vmem:[#allocation2 + $0x58] sm:$0xff] %vm526, %v453
        %539 = vst.msk [vmem:[#allocation2 + $0x60] sm:$0xff] %vm526, %v455
        %540 = vst.msk [vmem:[#allocation2 + $0x68] sm:$0xff] %vm526, %v457
        %541 = vst.msk [vmem:[#allocation2 + $0x70] sm:$0xff] %vm526, %v459
        %542 = vst.msk [vmem:[#allocation2 + $0x78] sm:$0xff] %vm526, %v461
        %543 = vst.msk [vmem:[#allocation2 + $0x80] sm:$0xff] %vm526, %v463
        %544 = vst.msk [vmem:[#allocation2 + $0x88] sm:$0xff] %vm526, %v465
        %545 = vst.msk [vmem:[#allocation2 + $0x90] sm:$0xff] %vm526, %v467
        %546 = vst.msk [vmem:[#allocation2 + $0x98] sm:$0xff] %vm526, %v469
        %547 = vst.msk [vmem:[#allocation2 + $0xa0] sm:$0xff] %vm526, %v471
        %548 = vst.msk [vmem:[#allocation2 + $0xa8] sm:$0xff] %vm526, %v473
        %549 = vst.msk [vmem:[#allocation2 + $0xb0] sm:$0xff] %vm526, %v475
        %550 = vst.msk [vmem:[#allocation2 + $0xb8] sm:$0xff] %vm526, %v477
        %551 = vst.msk [vmem:[#allocation2 + $0xc0] sm:$0xff] %vm526, %v479
        %552 = vst.msk [vmem:[#allocation2 + $0xc8] sm:$0xff] %vm526, %v481
        %553 = vst.msk [vmem:[#allocation2 + $0xd0] sm:$0xff] %vm526, %v483
        %554 = vst.msk [vmem:[#allocation2 + $0xd8] sm:$0xff] %vm526, %v485
        %555 = vst.msk [vmem:[#allocation2 + $0xe0] sm:$0xff] %vm526, %v487
        %556 = vst.msk [vmem:[#allocation2 + $0xe8] sm:$0xff] %vm526, %v489
        %557 = vst.msk [vmem:[#allocation2 + $0xf0] sm:$0xff] %vm526, %v491
        %558 = vst.msk [vmem:[#allocation2 + $0xf8] sm:$0xff] %vm526, %v493
        %v559 = vld [vmem:[%s272 + $0x2] sm:$0xff]
        %v560 = vld [vmem:[%s272 + $0xa] sm:$0xff]
        %v561 = vld [vmem:[%s272 + $0x1a] sm:$0xff]
        %v562 = vld [vmem:[%s272 + $0x22] sm:$0xff]
        %v563 = vld [vmem:[%s272 + $0x32] sm:$0xff]
        %v564 = vld [vmem:[%s272 + $0x3a] sm:$0xff]
        %v565 = vld [vmem:[%s272 + $0x4a] sm:$0xff]
        %v566 = vld [vmem:[%s272 + $0x52] sm:$0xff]
        %v567 = vld [vmem:[%s272 + $0x62] sm:$0xff]
        %v568 = vld [vmem:[%s272 + $0x6a] sm:$0xff]
        %v569 = vld [vmem:[%s272 + $0x7a] sm:$0xff]
        %v570 = vld [vmem:[%s272 + $0x82] sm:$0xff]
        %v571 = vld [vmem:[%s272 + $0x92] sm:$0xff]
        %v572 = vld [vmem:[%s272 + $0x9a] sm:$0xff]
        %v573 = vld [vmem:[%s272 + $0xaa] sm:$0xff]
        %v574 = vld [vmem:[%s272 + $0xb2] sm:$0xff]
        %v575 = vld [vmem:[%s272 + $0xc2] sm:$0xff]
        %v576 = vld [vmem:[%s272 + $0xca] sm:$0xff]
        %v577 = vld [vmem:[%s272 + $0xda] sm:$0xff]
        %v578 = vld [vmem:[%s272 + $0xe2] sm:$0xff]
        %v579 = vld [vmem:[%s272 + $0xf2] sm:$0xff]
        %v580 = vld [vmem:[%s272 + $0xfa] sm:$0xff]
        %v581 = vld [vmem:[%s272 + $0x10a] sm:$0xff]
        %v582 = vld [vmem:[%s272 + $0x112] sm:$0xff]
        %v583 = vld [vmem:[%s272 + $0x122] sm:$0xff]
        %v584 = vld [vmem:[%s272 + $0x12a] sm:$0xff]
        %v585 = vld [vmem:[%s272 + $0x13a] sm:$0xff]
        %v586 = vld [vmem:[%s272 + $0x142] sm:$0xff]
        %v587 = vld [vmem:[%s272 + $0x152] sm:$0xff]
        %v588 = vld [vmem:[%s272 + $0x15a] sm:$0xff]
        %v589 = vld [vmem:[%s272 + $0x16a] sm:$0xff]
        %v590 = vld [vmem:[%s272 + $0x172] sm:$0xff]
        %623 = vrot.lane.b32.xlu0 %v559, 8
        %v624 = vpop.permute.xlu0 %623
        %625 = vrot.lane.b32.xlu0 %v560, 8
        %v626 = vpop.permute.xlu0 %625
        %627 = vrot.lane.b32.xlu0 %v561, 8
        %v628 = vpop.permute.xlu0 %627
        %629 = vrot.lane.b32.xlu0 %v562, 8
        %v630 = vpop.permute.xlu0 %629
        %631 = vrot.lane.b32.xlu0 %v563, 8
        %v632 = vpop.permute.xlu0 %631
        %633 = vrot.lane.b32.xlu0 %v564, 8
        %v634 = vpop.permute.xlu0 %633
        %635 = vrot.lane.b32.xlu0 %v565, 8
        %v636 = vpop.permute.xlu0 %635
        %637 = vrot.lane.b32.xlu0 %v566, 8
        %v638 = vpop.permute.xlu0 %637
        %639 = vrot.lane.b32.xlu0 %v567, 8
        %v640 = vpop.permute.xlu0 %639
        %641 = vrot.lane.b32.xlu0 %v568, 8
        %v642 = vpop.permute.xlu0 %641
        %643 = vrot.lane.b32.xlu0 %v569, 8
        %v644 = vpop.permute.xlu0 %643
        %645 = vrot.lane.b32.xlu0 %v570, 8
        %v646 = vpop.permute.xlu0 %645
        %647 = vrot.lane.b32.xlu0 %v571, 8
        %v648 = vpop.permute.xlu0 %647
        %649 = vrot.lane.b32.xlu0 %v572, 8
        %v650 = vpop.permute.xlu0 %649
        %651 = vrot.lane.b32.xlu0 %v573, 8
        %v652 = vpop.permute.xlu0 %651
        %653 = vrot.lane.b32.xlu0 %v574, 8
        %v654 = vpop.permute.xlu0 %653
        %655 = vrot.lane.b32.xlu0 %v575, 8
        %v656 = vpop.permute.xlu0 %655
        %657 = vrot.lane.b32.xlu0 %v576, 8
        %v658 = vpop.permute.xlu0 %657
        %659 = vrot.lane.b32.xlu0 %v577, 8
        %v660 = vpop.permute.xlu0 %659
        %661 = vrot.lane.b32.xlu0 %v578, 8
        %v662 = vpop.permute.xlu0 %661
        %663 = vrot.lane.b32.xlu0 %v579, 8
        %v664 = vpop.permute.xlu0 %663
        %665 = vrot.lane.b32.xlu0 %v580, 8
        %v666 = vpop.permute.xlu0 %665
        %667 = vrot.lane.b32.xlu0 %v581, 8
        %v668 = vpop.permute.xlu0 %667
        %669 = vrot.lane.b32.xlu0 %v582, 8
        %v670 = vpop.permute.xlu0 %669
        %671 = vrot.lane.b32.xlu0 %v583, 8
        %v672 = vpop.permute.xlu0 %671
        %673 = vrot.lane.b32.xlu0 %v584, 8
        %v674 = vpop.permute.xlu0 %673
        %675 = vrot.lane.b32.xlu0 %v585, 8
        %v676 = vpop.permute.xlu0 %675
        %677 = vrot.lane.b32.xlu0 %v586, 8
        %v678 = vpop.permute.xlu0 %677
        %679 = vrot.lane.b32.xlu0 %v587, 8
        %v680 = vpop.permute.xlu0 %679
        %681 = vrot.lane.b32.xlu0 %v588, 8
        %v682 = vpop.permute.xlu0 %681
        %683 = vrot.lane.b32.xlu0 %v589, 8
        %v684 = vpop.permute.xlu0 %683
        %685 = vrot.lane.b32.xlu0 %v590, 8
        %v686 = vpop.permute.xlu0 %685
        %vm719 = vcmask 97344
        %720 = vst.msk [vmem:[#allocation2] sm:$0xff] %vm719, %v624
        %721 = vst.msk [vmem:[#allocation2 + $0x8] sm:$0xff] %vm719, %v626
        %722 = vst.msk [vmem:[#allocation2 + $0x10] sm:$0xff] %vm719, %v628
        %723 = vst.msk [vmem:[#allocation2 + $0x18] sm:$0xff] %vm719, %v630
        %724 = vst.msk [vmem:[#allocation2 + $0x20] sm:$0xff] %vm719, %v632
        %725 = vst.msk [vmem:[#allocation2 + $0x28] sm:$0xff] %vm719, %v634
        %726 = vst.msk [vmem:[#allocation2 + $0x30] sm:$0xff] %vm719, %v636
        %727 = vst.msk [vmem:[#allocation2 + $0x38] sm:$0xff] %vm719, %v638
        %728 = vst.msk [vmem:[#allocation2 + $0x40] sm:$0xff] %vm719, %v640
        %729 = vst.msk [vmem:[#allocation2 + $0x48] sm:$0xff] %vm719, %v642
        %730 = vst.msk [vmem:[#allocation2 + $0x50] sm:$0xff] %vm719, %v644
        %731 = vst.msk [vmem:[#allocation2 + $0x58] sm:$0xff] %vm719, %v646
        %732 = vst.msk [vmem:[#allocation2 + $0x60] sm:$0xff] %vm719, %v648
        %733 = vst.msk [vmem:[#allocation2 + $0x68] sm:$0xff] %vm719, %v650
        %734 = vst.msk [vmem:[#allocation2 + $0x70] sm:$0xff] %vm719, %v652
        %735 = vst.msk [vmem:[#allocation2 + $0x78] sm:$0xff] %vm719, %v654
        %736 = vst.msk [vmem:[#allocation2 + $0x80] sm:$0xff] %vm719, %v656
        %737 = vst.msk [vmem:[#allocation2 + $0x88] sm:$0xff] %vm719, %v658
        %738 = vst.msk [vmem:[#allocation2 + $0x90] sm:$0xff] %vm719, %v660
        %739 = vst.msk [vmem:[#allocation2 + $0x98] sm:$0xff] %vm719, %v662
        %740 = vst.msk [vmem:[#allocation2 + $0xa0] sm:$0xff] %vm719, %v664
        %741 = vst.msk [vmem:[#allocation2 + $0xa8] sm:$0xff] %vm719, %v666
        %742 = vst.msk [vmem:[#allocation2 + $0xb0] sm:$0xff] %vm719, %v668
        %743 = vst.msk [vmem:[#allocation2 + $0xb8] sm:$0xff] %vm719, %v670
        %744 = vst.msk [vmem:[#allocation2 + $0xc0] sm:$0xff] %vm719, %v672
        %745 = vst.msk [vmem:[#allocation2 + $0xc8] sm:$0xff] %vm719, %v674
        %746 = vst.msk [vmem:[#allocation2 + $0xd0] sm:$0xff] %vm719, %v676
        %747 = vst.msk [vmem:[#allocation2 + $0xd8] sm:$0xff] %vm719, %v678
        %748 = vst.msk [vmem:[#allocation2 + $0xe0] sm:$0xff] %vm719, %v680
        %749 = vst.msk [vmem:[#allocation2 + $0xe8] sm:$0xff] %vm719, %v682
        %750 = vst.msk [vmem:[#allocation2 + $0xf0] sm:$0xff] %vm719, %v684
        %751 = vst.msk [vmem:[#allocation2 + $0xf8] sm:$0xff] %vm719, %v686
        %s752 = scalar_lea.vmem %s272, 24
        %v753 = vld [vmem:[%s752] sm:$0xff]
        %v754 = vld [vmem:[%s752 + $0x8] sm:$0xff]
        %v755 = vld [vmem:[%s752 + $0x18] sm:$0xff]
        %v756 = vld [vmem:[%s752 + $0x20] sm:$0xff]
        %v757 = vld [vmem:[%s752 + $0x30] sm:$0xff]
        %v758 = vld [vmem:[%s752 + $0x38] sm:$0xff]
        %v759 = vld [vmem:[%s752 + $0x48] sm:$0xff]
        %v760 = vld [vmem:[%s752 + $0x50] sm:$0xff]
        %v761 = vld [vmem:[%s752 + $0x60] sm:$0xff]
        %v762 = vld [vmem:[%s752 + $0x68] sm:$0xff]
        %v763 = vld [vmem:[%s752 + $0x78] sm:$0xff]
        %v764 = vld [vmem:[%s752 + $0x80] sm:$0xff]
        %v765 = vld [vmem:[%s752 + $0x90] sm:$0xff]
        %v766 = vld [vmem:[%s752 + $0x98] sm:$0xff]
        %v767 = vld [vmem:[%s752 + $0xa8] sm:$0xff]
        %v768 = vld [vmem:[%s752 + $0xb0] sm:$0xff]
        %v769 = vld [vmem:[%s752 + $0xc0] sm:$0xff]
        %v770 = vld [vmem:[%s752 + $0xc8] sm:$0xff]
        %v771 = vld [vmem:[%s752 + $0xd8] sm:$0xff]
        %v772 = vld [vmem:[%s752 + $0xe0] sm:$0xff]
        %v773 = vld [vmem:[%s752 + $0xf0] sm:$0xff]
        %v774 = vld [vmem:[%s752 + $0xf8] sm:$0xff]
        %v775 = vld [vmem:[%s752 + $0x108] sm:$0xff]
        %v776 = vld [vmem:[%s752 + $0x110] sm:$0xff]
        %v777 = vld [vmem:[%s752 + $0x120] sm:$0xff]
        %v778 = vld [vmem:[%s752 + $0x128] sm:$0xff]
        %v779 = vld [vmem:[%s752 + $0x138] sm:$0xff]
        %v780 = vld [vmem:[%s752 + $0x140] sm:$0xff]
        %v781 = vld [vmem:[%s752 + $0x150] sm:$0xff]
        %v782 = vld [vmem:[%s752 + $0x158] sm:$0xff]
        %v783 = vld [vmem:[%s752 + $0x168] sm:$0xff]
        %v784 = vld [vmem:[%s752 + $0x170] sm:$0xff]
        %817 = vrot.lane.b32.xlu0 %v753, 12
        %v818 = vpop.permute.xlu0 %817
        %819 = vrot.lane.b32.xlu0 %v754, 12
        %v820 = vpop.permute.xlu0 %819
        %821 = vrot.lane.b32.xlu0 %v755, 12
        %v822 = vpop.permute.xlu0 %821
        %823 = vrot.lane.b32.xlu0 %v756, 12
        %v824 = vpop.permute.xlu0 %823
        %825 = vrot.lane.b32.xlu0 %v757, 12
        %v826 = vpop.permute.xlu0 %825
        %827 = vrot.lane.b32.xlu0 %v758, 12
        %v828 = vpop.permute.xlu0 %827
        %829 = vrot.lane.b32.xlu0 %v759, 12
        %v830 = vpop.permute.xlu0 %829
        %831 = vrot.lane.b32.xlu0 %v760, 12
        %v832 = vpop.permute.xlu0 %831
        %833 = vrot.lane.b32.xlu0 %v761, 12
        %v834 = vpop.permute.xlu0 %833
        %835 = vrot.lane.b32.xlu0 %v762, 12
        %v836 = vpop.permute.xlu0 %835
        %837 = vrot.lane.b32.xlu0 %v763, 12
        %v838 = vpop.permute.xlu0 %837
        %839 = vrot.lane.b32.xlu0 %v764, 12
        %v840 = vpop.permute.xlu0 %839
        %841 = vrot.lane.b32.xlu0 %v765, 12
        %v842 = vpop.permute.xlu0 %841
        %843 = vrot.lane.b32.xlu0 %v766, 12
        %v844 = vpop.permute.xlu0 %843
        %845 = vrot.lane.b32.xlu0 %v767, 12
        %v846 = vpop.permute.xlu0 %845
        %847 = vrot.lane.b32.xlu0 %v768, 12
        %v848 = vpop.permute.xlu0 %847
        %849 = vrot.lane.b32.xlu0 %v769, 12
        %v850 = vpop.permute.xlu0 %849
        %851 = vrot.lane.b32.xlu0 %v770, 12
        %v852 = vpop.permute.xlu0 %851
        %853 = vrot.lane.b32.xlu0 %v771, 12
        %v854 = vpop.permute.xlu0 %853
        %855 = vrot.lane.b32.xlu0 %v772, 12
        %v856 = vpop.permute.xlu0 %855
        %857 = vrot.lane.b32.xlu0 %v773, 12
        %v858 = vpop.permute.xlu0 %857
        %859 = vrot.lane.b32.xlu0 %v774, 12
        %v860 = vpop.permute.xlu0 %859
        %861 = vrot.lane.b32.xlu0 %v775, 12
        %v862 = vpop.permute.xlu0 %861
        %863 = vrot.lane.b32.xlu0 %v776, 12
        %v864 = vpop.permute.xlu0 %863
        %865 = vrot.lane.b32.xlu0 %v777, 12
        %v866 = vpop.permute.xlu0 %865
        %867 = vrot.lane.b32.xlu0 %v778, 12
        %v868 = vpop.permute.xlu0 %867
        %869 = vrot.lane.b32.xlu0 %v779, 12
        %v870 = vpop.permute.xlu0 %869
        %871 = vrot.lane.b32.xlu0 %v780, 12
        %v872 = vpop.permute.xlu0 %871
        %873 = vrot.lane.b32.xlu0 %v781, 12
        %v874 = vpop.permute.xlu0 %873
        %875 = vrot.lane.b32.xlu0 %v782, 12
        %v876 = vpop.permute.xlu0 %875
        %877 = vrot.lane.b32.xlu0 %v783, 12
        %v878 = vpop.permute.xlu0 %877
        %879 = vrot.lane.b32.xlu0 %v784, 12
        %v880 = vpop.permute.xlu0 %879
        %vm913 = vcmask 130144
        %914 = vst.msk [vmem:[#allocation2] sm:$0xff] %vm913, %v818
        %915 = vst.msk [vmem:[#allocation2 + $0x8] sm:$0xff] %vm913, %v820
        %916 = vst.msk [vmem:[#allocation2 + $0x10] sm:$0xff] %vm913, %v822
        %917 = vst.msk [vmem:[#allocation2 + $0x18] sm:$0xff] %vm913, %v824
        %918 = vst.msk [vmem:[#allocation2 + $0x20] sm:$0xff] %vm913, %v826
        %919 = vst.msk [vmem:[#allocation2 + $0x28] sm:$0xff] %vm913, %v828
        %920 = vst.msk [vmem:[#allocation2 + $0x30] sm:$0xff] %vm913, %v830
        %921 = vst.msk [vmem:[#allocation2 + $0x38] sm:$0xff] %vm913, %v832
        %922 = vst.msk [vmem:[#allocation2 + $0x40] sm:$0xff] %vm913, %v834
        %923 = vst.msk [vmem:[#allocation2 + $0x48] sm:$0xff] %vm913, %v836
        %924 = vst.msk [vmem:[#allocation2 + $0x50] sm:$0xff] %vm913, %v838
        %925 = vst.msk [vmem:[#allocation2 + $0x58] sm:$0xff] %vm913, %v840
        %926 = vst.msk [vmem:[#allocation2 + $0x60] sm:$0xff] %vm913, %v842
        %927 = vst.msk [vmem:[#allocation2 + $0x68] sm:$0xff] %vm913, %v844
        %928 = vst.msk [vmem:[#allocation2 + $0x70] sm:$0xff] %vm913, %v846
        %929 = vst.msk [vmem:[#allocation2 + $0x78] sm:$0xff] %vm913, %v848
        %930 = vst.msk [vmem:[#allocation2 + $0x80] sm:$0xff] %vm913, %v850
        %931 = vst.msk [vmem:[#allocation2 + $0x88] sm:$0xff] %vm913, %v852
        %932 = vst.msk [vmem:[#allocation2 + $0x90] sm:$0xff] %vm913, %v854
        %933 = vst.msk [vmem:[#allocation2 + $0x98] sm:$0xff] %vm913, %v856
        %934 = vst.msk [vmem:[#allocation2 + $0xa0] sm:$0xff] %vm913, %v858
        %935 = vst.msk [vmem:[#allocation2 + $0xa8] sm:$0xff] %vm913, %v860
        %936 = vst.msk [vmem:[#allocation2 + $0xb0] sm:$0xff] %vm913, %v862
        %937 = vst.msk [vmem:[#allocation2 + $0xb8] sm:$0xff] %vm913, %v864
        %938 = vst.msk [vmem:[#allocation2 + $0xc0] sm:$0xff] %vm913, %v866
        %939 = vst.msk [vmem:[#allocation2 + $0xc8] sm:$0xff] %vm913, %v868
        %940 = vst.msk [vmem:[#allocation2 + $0xd0] sm:$0xff] %vm913, %v870
        %941 = vst.msk [vmem:[#allocation2 + $0xd8] sm:$0xff] %vm913, %v872
        %942 = vst.msk [vmem:[#allocation2 + $0xe0] sm:$0xff] %vm913, %v874
        %943 = vst.msk [vmem:[#allocation2 + $0xe8] sm:$0xff] %vm913, %v876
        %944 = vst.msk [vmem:[#allocation2 + $0xf0] sm:$0xff] %vm913, %v878
        %945 = vst.msk [vmem:[#allocation2 + $0xf8] sm:$0xff] %vm913, %v880
        %v946 = vld [vmem:[%s752 + $0x1] sm:$0xff]
        %v947 = vld [vmem:[%s752 + $0x9] sm:$0xff]
        %v948 = vld [vmem:[%s752 + $0x19] sm:$0xff]
        %v949 = vld [vmem:[%s752 + $0x21] sm:$0xff]
        %v950 = vld [vmem:[%s752 + $0x31] sm:$0xff]
        %v951 = vld [vmem:[%s752 + $0x39] sm:$0xff]
        %v952 = vld [vmem:[%s752 + $0x49] sm:$0xff]
        %v953 = vld [vmem:[%s752 + $0x51] sm:$0xff]
        %v954 = vld [vmem:[%s752 + $0x61] sm:$0xff]
        %v955 = vld [vmem:[%s752 + $0x69] sm:$0xff]
        %v956 = vld [vmem:[%s752 + $0x79] sm:$0xff]
        %v957 = vld [vmem:[%s752 + $0x81] sm:$0xff]
        %v958 = vld [vmem:[%s752 + $0x91] sm:$0xff]
        %v959 = vld [vmem:[%s752 + $0x99] sm:$0xff]
        %v960 = vld [vmem:[%s752 + $0xa9] sm:$0xff]
        %v961 = vld [vmem:[%s752 + $0xb1] sm:$0xff]
        %v962 = vld [vmem:[%s752 + $0xc1] sm:$0xff]
        %v963 = vld [vmem:[%s752 + $0xc9] sm:$0xff]
        %v964 = vld [vmem:[%s752 + $0xd9] sm:$0xff]
        %v965 = vld [vmem:[%s752 + $0xe1] sm:$0xff]
        %v966 = vld [vmem:[%s752 + $0xf1] sm:$0xff]
        %v967 = vld [vmem:[%s752 + $0xf9] sm:$0xff]
        %v968 = vld [vmem:[%s752 + $0x109] sm:$0xff]
        %v969 = vld [vmem:[%s752 + $0x111] sm:$0xff]
        %v970 = vld [vmem:[%s752 + $0x121] sm:$0xff]
        %v971 = vld [vmem:[%s752 + $0x129] sm:$0xff]
        %v972 = vld [vmem:[%s752 + $0x139] sm:$0xff]
        %v973 = vld [vmem:[%s752 + $0x141] sm:$0xff]
        %v974 = vld [vmem:[%s752 + $0x151] sm:$0xff]
        %v975 = vld [vmem:[%s752 + $0x159] sm:$0xff]
        %v976 = vld [vmem:[%s752 + $0x169] sm:$0xff]
        %v977 = vld [vmem:[%s752 + $0x171] sm:$0xff]
        %1010 = vrot.lane.b32.xlu0 %v946, 16
        %v1011 = vpop.permute.xlu0 %1010
        %1012 = vrot.lane.b32.xlu0 %v947, 16
        %v1013 = vpop.permute.xlu0 %1012
        %1014 = vrot.lane.b32.xlu0 %v948, 16
        %v1015 = vpop.permute.xlu0 %1014
        %1016 = vrot.lane.b32.xlu0 %v949, 16
        %v1017 = vpop.permute.xlu0 %1016
        %1018 = vrot.lane.b32.xlu0 %v950, 16
        %v1019 = vpop.permute.xlu0 %1018
        %1020 = vrot.lane.b32.xlu0 %v951, 16
        %v1021 = vpop.permute.xlu0 %1020
        %1022 = vrot.lane.b32.xlu0 %v952, 16
        %v1023 = vpop.permute.xlu0 %1022
        %1024 = vrot.lane.b32.xlu0 %v953, 16
        %v1025 = vpop.permute.xlu0 %1024
        %1026 = vrot.lane.b32.xlu0 %v954, 16
        %v1027 = vpop.permute.xlu0 %1026
        %1028 = vrot.lane.b32.xlu0 %v955, 16
        %v1029 = vpop.permute.xlu0 %1028
        %1030 = vrot.lane.b32.xlu0 %v956, 16
        %v1031 = vpop.permute.xlu0 %1030
        %1032 = vrot.lane.b32.xlu0 %v957, 16
        %v1033 = vpop.permute.xlu0 %1032
        %1034 = vrot.lane.b32.xlu0 %v958, 16
        %v1035 = vpop.permute.xlu0 %1034
        %1036 = vrot.lane.b32.xlu0 %v959, 16
        %v1037 = vpop.permute.xlu0 %1036
        %1038 = vrot.lane.b32.xlu0 %v960, 16
        %v1039 = vpop.permute.xlu0 %1038
        %1040 = vrot.lane.b32.xlu0 %v961, 16
        %v1041 = vpop.permute.xlu0 %1040
        %1042 = vrot.lane.b32.xlu0 %v962, 16
        %v1043 = vpop.permute.xlu0 %1042
        %1044 = vrot.lane.b32.xlu0 %v963, 16
        %v1045 = vpop.permute.xlu0 %1044
        %1046 = vrot.lane.b32.xlu0 %v964, 16
        %v1047 = vpop.permute.xlu0 %1046
        %1048 = vrot.lane.b32.xlu0 %v965, 16
        %v1049 = vpop.permute.xlu0 %1048
        %1050 = vrot.lane.b32.xlu0 %v966, 16
        %v1051 = vpop.permute.xlu0 %1050
        %1052 = vrot.lane.b32.xlu0 %v967, 16
        %v1053 = vpop.permute.xlu0 %1052
        %1054 = vrot.lane.b32.xlu0 %v968, 16
        %v1055 = vpop.permute.xlu0 %1054
        %1056 = vrot.lane.b32.xlu0 %v969, 16
        %v1057 = vpop.permute.xlu0 %1056
        %1058 = vrot.lane.b32.xlu0 %v970, 16
        %v1059 = vpop.permute.xlu0 %1058
        %1060 = vrot.lane.b32.xlu0 %v971, 16
        %v1061 = vpop.permute.xlu0 %1060
        %1062 = vrot.lane.b32.xlu0 %v972, 16
        %v1063 = vpop.permute.xlu0 %1062
        %1064 = vrot.lane.b32.xlu0 %v973, 16
        %v1065 = vpop.permute.xlu0 %1064
        %1066 = vrot.lane.b32.xlu0 %v974, 16
        %v1067 = vpop.permute.xlu0 %1066
        %1068 = vrot.lane.b32.xlu0 %v975, 16
        %v1069 = vpop.permute.xlu0 %1068
        %1070 = vrot.lane.b32.xlu0 %v976, 16
        %v1071 = vpop.permute.xlu0 %1070
        %1072 = vrot.lane.b32.xlu0 %v977, 16
        %v1073 = vpop.permute.xlu0 %1072
        %vm1106 = vcmask 162944
        %1107 = vst.msk [vmem:[#allocation2] sm:$0xff] %vm1106, %v1011
        %1108 = vst.msk [vmem:[#allocation2 + $0x8] sm:$0xff] %vm1106, %v1013
        %1109 = vst.msk [vmem:[#allocation2 + $0x10] sm:$0xff] %vm1106, %v1015
        %1110 = vst.msk [vmem:[#allocation2 + $0x18] sm:$0xff] %vm1106, %v1017
        %1111 = vst.msk [vmem:[#allocation2 + $0x20] sm:$0xff] %vm1106, %v1019
        %1112 = vst.msk [vmem:[#allocation2 + $0x28] sm:$0xff] %vm1106, %v1021
        %1113 = vst.msk [vmem:[#allocation2 + $0x30] sm:$0xff] %vm1106, %v1023
        %1114 = vst.msk [vmem:[#allocation2 + $0x38] sm:$0xff] %vm1106, %v1025
        %1115 = vst.msk [vmem:[#allocation2 + $0x40] sm:$0xff] %vm1106, %v1027
        %1116 = vst.msk [vmem:[#allocation2 + $0x48] sm:$0xff] %vm1106, %v1029
        %1117 = vst.msk [vmem:[#allocation2 + $0x50] sm:$0xff] %vm1106, %v1031
        %1118 = vst.msk [vmem:[#allocation2 + $0x58] sm:$0xff] %vm1106, %v1033
        %1119 = vst.msk [vmem:[#allocation2 + $0x60] sm:$0xff] %vm1106, %v1035
        %1120 = vst.msk [vmem:[#allocation2 + $0x68] sm:$0xff] %vm1106, %v1037
        %1121 = vst.msk [vmem:[#allocation2 + $0x70] sm:$0xff] %vm1106, %v1039
        %1122 = vst.msk [vmem:[#allocation2 + $0x78] sm:$0xff] %vm1106, %v1041
        %1123 = vst.msk [vmem:[#allocation2 + $0x80] sm:$0xff] %vm1106, %v1043
        %1124 = vst.msk [vmem:[#allocation2 + $0x88] sm:$0xff] %vm1106, %v1045
        %1125 = vst.msk [vmem:[#allocation2 + $0x90] sm:$0xff] %vm1106, %v1047
        %1126 = vst.msk [vmem:[#allocation2 + $0x98] sm:$0xff] %vm1106, %v1049
        %1127 = vst.msk [vmem:[#allocation2 + $0xa0] sm:$0xff] %vm1106, %v1051
        %1128 = vst.msk [vmem:[#allocation2 + $0xa8] sm:$0xff] %vm1106, %v1053
        %1129 = vst.msk [vmem:[#allocation2 + $0xb0] sm:$0xff] %vm1106, %v1055
        %1130 = vst.msk [vmem:[#allocation2 + $0xb8] sm:$0xff] %vm1106, %v1057
        %1131 = vst.msk [vmem:[#allocation2 + $0xc0] sm:$0xff] %vm1106, %v1059
        %1132 = vst.msk [vmem:[#allocation2 + $0xc8] sm:$0xff] %vm1106, %v1061
        %1133 = vst.msk [vmem:[#allocation2 + $0xd0] sm:$0xff] %vm1106, %v1063
        %1134 = vst.msk [vmem:[#allocation2 + $0xd8] sm:$0xff] %vm1106, %v1065
        %1135 = vst.msk [vmem:[#allocation2 + $0xe0] sm:$0xff] %vm1106, %v1067
        %1136 = vst.msk [vmem:[#allocation2 + $0xe8] sm:$0xff] %vm1106, %v1069
        %1137 = vst.msk [vmem:[#allocation2 + $0xf0] sm:$0xff] %vm1106, %v1071
        %1138 = vst.msk [vmem:[#allocation2 + $0xf8] sm:$0xff] %vm1106, %v1073
        %v1139 = vld [vmem:[%s752 + $0x2] sm:$0xff]
        %v1140 = vld [vmem:[%s752 + $0xa] sm:$0xff]
        %v1141 = vld [vmem:[%s752 + $0x1a] sm:$0xff]
        %v1142 = vld [vmem:[%s752 + $0x22] sm:$0xff]
        %v1143 = vld [vmem:[%s752 + $0x32] sm:$0xff]
        %v1144 = vld [vmem:[%s752 + $0x3a] sm:$0xff]
        %v1145 = vld [vmem:[%s752 + $0x4a] sm:$0xff]
        %v1146 = vld [vmem:[%s752 + $0x52] sm:$0xff]
        %v1147 = vld [vmem:[%s752 + $0x62] sm:$0xff]
        %v1148 = vld [vmem:[%s752 + $0x6a] sm:$0xff]
        %v1149 = vld [vmem:[%s752 + $0x7a] sm:$0xff]
        %v1150 = vld [vmem:[%s752 + $0x82] sm:$0xff]
        %v1151 = vld [vmem:[%s752 + $0x92] sm:$0xff]
        %v1152 = vld [vmem:[%s752 + $0x9a] sm:$0xff]
        %v1153 = vld [vmem:[%s752 + $0xaa] sm:$0xff]
        %v1154 = vld [vmem:[%s752 + $0xb2] sm:$0xff]
        %v1155 = vld [vmem:[%s752 + $0xc2] sm:$0xff]
        %v1156 = vld [vmem:[%s752 + $0xca] sm:$0xff]
        %v1157 = vld [vmem:[%s752 + $0xda] sm:$0xff]
        %v1158 = vld [vmem:[%s752 + $0xe2] sm:$0xff]
        %v1159 = vld [vmem:[%s752 + $0xf2] sm:$0xff]
        %v1160 = vld [vmem:[%s752 + $0xfa] sm:$0xff]
        %v1161 = vld [vmem:[%s752 + $0x10a] sm:$0xff]
        %v1162 = vld [vmem:[%s752 + $0x112] sm:$0xff]
        %v1163 = vld [vmem:[%s752 + $0x122] sm:$0xff]
        %v1164 = vld [vmem:[%s752 + $0x12a] sm:$0xff]
        %v1165 = vld [vmem:[%s752 + $0x13a] sm:$0xff]
        %v1166 = vld [vmem:[%s752 + $0x142] sm:$0xff]
        %v1167 = vld [vmem:[%s752 + $0x152] sm:$0xff]
        %v1168 = vld [vmem:[%s752 + $0x15a] sm:$0xff]
        %v1169 = vld [vmem:[%s752 + $0x16a] sm:$0xff]
        %v1170 = vld [vmem:[%s752 + $0x172] sm:$0xff]
        %1203 = vrot.lane.b32.xlu0 %v1139, 20
        %v1204 = vpop.permute.xlu0 %1203
        %1205 = vrot.lane.b32.xlu0 %v1140, 20
        %v1206 = vpop.permute.xlu0 %1205
        %1207 = vrot.lane.b32.xlu0 %v1141, 20
        %v1208 = vpop.permute.xlu0 %1207
        %1209 = vrot.lane.b32.xlu0 %v1142, 20
        %v1210 = vpop.permute.xlu0 %1209
        %1211 = vrot.lane.b32.xlu0 %v1143, 20
        %v1212 = vpop.permute.xlu0 %1211
        %1213 = vrot.lane.b32.xlu0 %v1144, 20
        %v1214 = vpop.permute.xlu0 %1213
        %1215 = vrot.lane.b32.xlu0 %v1145, 20
        %v1216 = vpop.permute.xlu0 %1215
        %1217 = vrot.lane.b32.xlu0 %v1146, 20
        %v1218 = vpop.permute.xlu0 %1217
        %1219 = vrot.lane.b32.xlu0 %v1147, 20
        %v1220 = vpop.permute.xlu0 %1219
        %1221 = vrot.lane.b32.xlu0 %v1148, 20
        %v1222 = vpop.permute.xlu0 %1221
        %1223 = vrot.lane.b32.xlu0 %v1149, 20
        %v1224 = vpop.permute.xlu0 %1223
        %1225 = vrot.lane.b32.xlu0 %v1150, 20
        %v1226 = vpop.permute.xlu0 %1225
        %1227 = vrot.lane.b32.xlu0 %v1151, 20
        %v1228 = vpop.permute.xlu0 %1227
        %1229 = vrot.lane.b32.xlu0 %v1152, 20
        %v1230 = vpop.permute.xlu0 %1229
        %1231 = vrot.lane.b32.xlu0 %v1153, 20
        %v1232 = vpop.permute.xlu0 %1231
        %1233 = vrot.lane.b32.xlu0 %v1154, 20
        %v1234 = vpop.permute.xlu0 %1233
        %1235 = vrot.lane.b32.xlu0 %v1155, 20
        %v1236 = vpop.permute.xlu0 %1235
        %1237 = vrot.lane.b32.xlu0 %v1156, 20
        %v1238 = vpop.permute.xlu0 %1237
        %1239 = vrot.lane.b32.xlu0 %v1157, 20
        %v1240 = vpop.permute.xlu0 %1239
        %1241 = vrot.lane.b32.xlu0 %v1158, 20
        %v1242 = vpop.permute.xlu0 %1241
        %1243 = vrot.lane.b32.xlu0 %v1159, 20
        %v1244 = vpop.permute.xlu0 %1243
        %1245 = vrot.lane.b32.xlu0 %v1160, 20
        %v1246 = vpop.permute.xlu0 %1245
        %1247 = vrot.lane.b32.xlu0 %v1161, 20
        %v1248 = vpop.permute.xlu0 %1247
        %1249 = vrot.lane.b32.xlu0 %v1162, 20
        %v1250 = vpop.permute.xlu0 %1249
        %1251 = vrot.lane.b32.xlu0 %v1163, 20
        %v1252 = vpop.permute.xlu0 %1251
        %1253 = vrot.lane.b32.xlu0 %v1164, 20
        %v1254 = vpop.permute.xlu0 %1253
        %1255 = vrot.lane.b32.xlu0 %v1165, 20
        %v1256 = vpop.permute.xlu0 %1255
        %1257 = vrot.lane.b32.xlu0 %v1166, 20
        %v1258 = vpop.permute.xlu0 %1257
        %1259 = vrot.lane.b32.xlu0 %v1167, 20
        %v1260 = vpop.permute.xlu0 %1259
        %1261 = vrot.lane.b32.xlu0 %v1168, 20
        %v1262 = vpop.permute.xlu0 %1261
        %1263 = vrot.lane.b32.xlu0 %v1169, 20
        %v1264 = vpop.permute.xlu0 %1263
        %1265 = vrot.lane.b32.xlu0 %v1170, 20
        %v1266 = vpop.permute.xlu0 %1265
        %vm1299 = vcmask 195744
        %1300 = vst.msk [vmem:[#allocation2] sm:$0xff] %vm1299, %v1204
        %1301 = vst.msk [vmem:[#allocation2 + $0x8] sm:$0xff] %vm1299, %v1206
        %1302 = vst.msk [vmem:[#allocation2 + $0x10] sm:$0xff] %vm1299, %v1208
        %1303 = vst.msk [vmem:[#allocation2 + $0x18] sm:$0xff] %vm1299, %v1210
        %1304 = vst.msk [vmem:[#allocation2 + $0x20] sm:$0xff] %vm1299, %v1212
        %1305 = vst.msk [vmem:[#allocation2 + $0x28] sm:$0xff] %vm1299, %v1214
        %1306 = vst.msk [vmem:[#allocation2 + $0x30] sm:$0xff] %vm1299, %v1216
        %1307 = vst.msk [vmem:[#allocation2 + $0x38] sm:$0xff] %vm1299, %v1218
        %1308 = vst.msk [vmem:[#allocation2 + $0x40] sm:$0xff] %vm1299, %v1220
        %1309 = vst.msk [vmem:[#allocation2 + $0x48] sm:$0xff] %vm1299, %v1222
        %1310 = vst.msk [vmem:[#allocation2 + $0x50] sm:$0xff] %vm1299, %v1224
        %1311 = vst.msk [vmem:[#allocation2 + $0x58] sm:$0xff] %vm1299, %v1226
        %1312 = vst.msk [vmem:[#allocation2 + $0x60] sm:$0xff] %vm1299, %v1228
        %1313 = vst.msk [vmem:[#allocation2 + $0x68] sm:$0xff] %vm1299, %v1230
        %1314 = vst.msk [vmem:[#allocation2 + $0x70] sm:$0xff] %vm1299, %v1232
        %1315 = vst.msk [vmem:[#allocation2 + $0x78] sm:$0xff] %vm1299, %v1234
        %1316 = vst.msk [vmem:[#allocation2 + $0x80] sm:$0xff] %vm1299, %v1236
        %1317 = vst.msk [vmem:[#allocation2 + $0x88] sm:$0xff] %vm1299, %v1238
        %1318 = vst.msk [vmem:[#allocation2 + $0x90] sm:$0xff] %vm1299, %v1240
        %1319 = vst.msk [vmem:[#allocation2 + $0x98] sm:$0xff] %vm1299, %v1242
        %1320 = vst.msk [vmem:[#allocation2 + $0xa0] sm:$0xff] %vm1299, %v1244
        %1321 = vst.msk [vmem:[#allocation2 + $0xa8] sm:$0xff] %vm1299, %v1246
        %1322 = vst.msk [vmem:[#allocation2 + $0xb0] sm:$0xff] %vm1299, %v1248
        %1323 = vst.msk [vmem:[#allocation2 + $0xb8] sm:$0xff] %vm1299, %v1250
        %1324 = vst.msk [vmem:[#allocation2 + $0xc0] sm:$0xff] %vm1299, %v1252
        %1325 = vst.msk [vmem:[#allocation2 + $0xc8] sm:$0xff] %vm1299, %v1254
        %1326 = vst.msk [vmem:[#allocation2 + $0xd0] sm:$0xff] %vm1299, %v1256
        %1327 = vst.msk [vmem:[#allocation2 + $0xd8] sm:$0xff] %vm1299, %v1258
        %1328 = vst.msk [vmem:[#allocation2 + $0xe0] sm:$0xff] %vm1299, %v1260
        %1329 = vst.msk [vmem:[#allocation2 + $0xe8] sm:$0xff] %vm1299, %v1262
        %1330 = vst.msk [vmem:[#allocation2 + $0xf0] sm:$0xff] %vm1299, %v1264
        %1331 = vst.msk [vmem:[#allocation2 + $0xf8] sm:$0xff] %vm1299, %v1266
        %s1332 = scalar_lea.vmem %s272, 48
        %v1333 = vld [vmem:[%s1332] sm:$0xff]
        %v1334 = vld [vmem:[%s1332 + $0x8] sm:$0xff]
        %v1335 = vld [vmem:[%s1332 + $0x18] sm:$0xff]
        %v1336 = vld [vmem:[%s1332 + $0x20] sm:$0xff]
        %v1337 = vld [vmem:[%s1332 + $0x30] sm:$0xff]
        %v1338 = vld [vmem:[%s1332 + $0x38] sm:$0xff]
        %v1339 = vld [vmem:[%s1332 + $0x48] sm:$0xff]
        %v1340 = vld [vmem:[%s1332 + $0x50] sm:$0xff]
        %v1341 = vld [vmem:[%s1332 + $0x60] sm:$0xff]
        %v1342 = vld [vmem:[%s1332 + $0x68] sm:$0xff]
        %v1343 = vld [vmem:[%s1332 + $0x78] sm:$0xff]
        %v1344 = vld [vmem:[%s1332 + $0x80] sm:$0xff]
        %v1345 = vld [vmem:[%s1332 + $0x90] sm:$0xff]
        %v1346 = vld [vmem:[%s1332 + $0x98] sm:$0xff]
        %v1347 = vld [vmem:[%s1332 + $0xa8] sm:$0xff]
        %v1348 = vld [vmem:[%s1332 + $0xb0] sm:$0xff]
        %v1349 = vld [vmem:[%s1332 + $0xc0] sm:$0xff]
        %v1350 = vld [vmem:[%s1332 + $0xc8] sm:$0xff]
        %v1351 = vld [vmem:[%s1332 + $0xd8] sm:$0xff]
        %v1352 = vld [vmem:[%s1332 + $0xe0] sm:$0xff]
        %v1353 = vld [vmem:[%s1332 + $0xf0] sm:$0xff]
        %v1354 = vld [vmem:[%s1332 + $0xf8] sm:$0xff]
        %v1355 = vld [vmem:[%s1332 + $0x108] sm:$0xff]
        %v1356 = vld [vmem:[%s1332 + $0x110] sm:$0xff]
        %v1357 = vld [vmem:[%s1332 + $0x120] sm:$0xff]
        %v1358 = vld [vmem:[%s1332 + $0x128] sm:$0xff]
        %v1359 = vld [vmem:[%s1332 + $0x138] sm:$0xff]
        %v1360 = vld [vmem:[%s1332 + $0x140] sm:$0xff]
        %v1361 = vld [vmem:[%s1332 + $0x150] sm:$0xff]
        %v1362 = vld [vmem:[%s1332 + $0x158] sm:$0xff]
        %v1363 = vld [vmem:[%s1332 + $0x168] sm:$0xff]
        %v1364 = vld [vmem:[%s1332 + $0x170] sm:$0xff]
        %1397 = vrot.lane.b32.xlu0 %v1333, 24
        %v1398 = vpop.permute.xlu0 %1397
        %1399 = vrot.lane.b32.xlu0 %v1334, 24
        %v1400 = vpop.permute.xlu0 %1399
        %1401 = vrot.lane.b32.xlu0 %v1335, 24
        %v1402 = vpop.permute.xlu0 %1401
        %1403 = vrot.lane.b32.xlu0 %v1336, 24
        %v1404 = vpop.permute.xlu0 %1403
        %1405 = vrot.lane.b32.xlu0 %v1337, 24
        %v1406 = vpop.permute.xlu0 %1405
        %1407 = vrot.lane.b32.xlu0 %v1338, 24
        %v1408 = vpop.permute.xlu0 %1407
        %1409 = vrot.lane.b32.xlu0 %v1339, 24
        %v1410 = vpop.permute.xlu0 %1409
        %1411 = vrot.lane.b32.xlu0 %v1340, 24
        %v1412 = vpop.permute.xlu0 %1411
        %1413 = vrot.lane.b32.xlu0 %v1341, 24
        %v1414 = vpop.permute.xlu0 %1413
        %1415 = vrot.lane.b32.xlu0 %v1342, 24
        %v1416 = vpop.permute.xlu0 %1415
        %1417 = vrot.lane.b32.xlu0 %v1343, 24
        %v1418 = vpop.permute.xlu0 %1417
        %1419 = vrot.lane.b32.xlu0 %v1344, 24
        %v1420 = vpop.permute.xlu0 %1419
        %1421 = vrot.lane.b32.xlu0 %v1345, 24
        %v1422 = vpop.permute.xlu0 %1421
        %1423 = vrot.lane.b32.xlu0 %v1346, 24
        %v1424 = vpop.permute.xlu0 %1423
        %1425 = vrot.lane.b32.xlu0 %v1347, 24
        %v1426 = vpop.permute.xlu0 %1425
        %1427 = vrot.lane.b32.xlu0 %v1348, 24
        %v1428 = vpop.permute.xlu0 %1427
        %1429 = vrot.lane.b32.xlu0 %v1349, 24
        %v1430 = vpop.permute.xlu0 %1429
        %1431 = vrot.lane.b32.xlu0 %v1350, 24
        %v1432 = vpop.permute.xlu0 %1431
        %1433 = vrot.lane.b32.xlu0 %v1351, 24
        %v1434 = vpop.permute.xlu0 %1433
        %1435 = vrot.lane.b32.xlu0 %v1352, 24
        %v1436 = vpop.permute.xlu0 %1435
        %1437 = vrot.lane.b32.xlu0 %v1353, 24
        %v1438 = vpop.permute.xlu0 %1437
        %1439 = vrot.lane.b32.xlu0 %v1354, 24
        %v1440 = vpop.permute.xlu0 %1439
        %1441 = vrot.lane.b32.xlu0 %v1355, 24
        %v1442 = vpop.permute.xlu0 %1441
        %1443 = vrot.lane.b32.xlu0 %v1356, 24
        %v1444 = vpop.permute.xlu0 %1443
        %1445 = vrot.lane.b32.xlu0 %v1357, 24
        %v1446 = vpop.permute.xlu0 %1445
        %1447 = vrot.lane.b32.xlu0 %v1358, 24
        %v1448 = vpop.permute.xlu0 %1447
        %1449 = vrot.lane.b32.xlu0 %v1359, 24
        %v1450 = vpop.permute.xlu0 %1449
        %1451 = vrot.lane.b32.xlu0 %v1360, 24
        %v1452 = vpop.permute.xlu0 %1451
        %1453 = vrot.lane.b32.xlu0 %v1361, 24
        %v1454 = vpop.permute.xlu0 %1453
        %1455 = vrot.lane.b32.xlu0 %v1362, 24
        %v1456 = vpop.permute.xlu0 %1455
        %1457 = vrot.lane.b32.xlu0 %v1363, 24
        %v1458 = vpop.permute.xlu0 %1457
        %1459 = vrot.lane.b32.xlu0 %v1364, 24
        %v1460 = vpop.permute.xlu0 %1459
        %vm1493 = vcmask 228544
        %1494 = vst.msk [vmem:[#allocation2] sm:$0xff] %vm1493, %v1398
        %1495 = vst.msk [vmem:[#allocation2 + $0x8] sm:$0xff] %vm1493, %v1400
        %1496 = vst.msk [vmem:[#allocation2 + $0x10] sm:$0xff] %vm1493, %v1402
        %1497 = vst.msk [vmem:[#allocation2 + $0x18] sm:$0xff] %vm1493, %v1404
        %1498 = vst.msk [vmem:[#allocation2 + $0x20] sm:$0xff] %vm1493, %v1406
        %1499 = vst.msk [vmem:[#allocation2 + $0x28] sm:$0xff] %vm1493, %v1408
        %1500 = vst.msk [vmem:[#allocation2 + $0x30] sm:$0xff] %vm1493, %v1410
        %1501 = vst.msk [vmem:[#allocation2 + $0x38] sm:$0xff] %vm1493, %v1412
        %1502 = vst.msk [vmem:[#allocation2 + $0x40] sm:$0xff] %vm1493, %v1414
        %1503 = vst.msk [vmem:[#allocation2 + $0x48] sm:$0xff] %vm1493, %v1416
        %1504 = vst.msk [vmem:[#allocation2 + $0x50] sm:$0xff] %vm1493, %v1418
        %1505 = vst.msk [vmem:[#allocation2 + $0x58] sm:$0xff] %vm1493, %v1420
        %1506 = vst.msk [vmem:[#allocation2 + $0x60] sm:$0xff] %vm1493, %v1422
        %1507 = vst.msk [vmem:[#allocation2 + $0x68] sm:$0xff] %vm1493, %v1424
        %1508 = vst.msk [vmem:[#allocation2 + $0x70] sm:$0xff] %vm1493, %v1426
        %1509 = vst.msk [vmem:[#allocation2 + $0x78] sm:$0xff] %vm1493, %v1428
        %1510 = vst.msk [vmem:[#allocation2 + $0x80] sm:$0xff] %vm1493, %v1430
        %1511 = vst.msk [vmem:[#allocation2 + $0x88] sm:$0xff] %vm1493, %v1432
        %1512 = vst.msk [vmem:[#allocation2 + $0x90] sm:$0xff] %vm1493, %v1434
        %1513 = vst.msk [vmem:[#allocation2 + $0x98] sm:$0xff] %vm1493, %v1436
        %1514 = vst.msk [vmem:[#allocation2 + $0xa0] sm:$0xff] %vm1493, %v1438
        %1515 = vst.msk [vmem:[#allocation2 + $0xa8] sm:$0xff] %vm1493, %v1440
        %1516 = vst.msk [vmem:[#allocation2 + $0xb0] sm:$0xff] %vm1493, %v1442
        %1517 = vst.msk [vmem:[#allocation2 + $0xb8] sm:$0xff] %vm1493, %v1444
        %1518 = vst.msk [vmem:[#allocation2 + $0xc0] sm:$0xff] %vm1493, %v1446
        %1519 = vst.msk [vmem:[#allocation2 + $0xc8] sm:$0xff] %vm1493, %v1448
        %1520 = vst.msk [vmem:[#allocation2 + $0xd0] sm:$0xff] %vm1493, %v1450
        %1521 = vst.msk [vmem:[#allocation2 + $0xd8] sm:$0xff] %vm1493, %v1452
        %1522 = vst.msk [vmem:[#allocation2 + $0xe0] sm:$0xff] %vm1493, %v1454
        %1523 = vst.msk [vmem:[#allocation2 + $0xe8] sm:$0xff] %vm1493, %v1456
        %1524 = vst.msk [vmem:[#allocation2 + $0xf0] sm:$0xff] %vm1493, %v1458
        %1525 = vst.msk [vmem:[#allocation2 + $0xf8] sm:$0xff] %vm1493, %v1460
        %v1526 = vld [vmem:[%s1332 + $0x1] sm:$0xff]
        %v1527 = vld [vmem:[%s1332 + $0x9] sm:$0xff]
        %v1528 = vld [vmem:[%s1332 + $0x19] sm:$0xff]
        %v1529 = vld [vmem:[%s1332 + $0x21] sm:$0xff]
        %v1530 = vld [vmem:[%s1332 + $0x31] sm:$0xff]
        %v1531 = vld [vmem:[%s1332 + $0x39] sm:$0xff]
        %v1532 = vld [vmem:[%s1332 + $0x49] sm:$0xff]
        %v1533 = vld [vmem:[%s1332 + $0x51] sm:$0xff]
        %v1534 = vld [vmem:[%s1332 + $0x61] sm:$0xff]
        %v1535 = vld [vmem:[%s1332 + $0x69] sm:$0xff]
        %v1536 = vld [vmem:[%s1332 + $0x79] sm:$0xff]
        %v1537 = vld [vmem:[%s1332 + $0x81] sm:$0xff]
        %v1538 = vld [vmem:[%s1332 + $0x91] sm:$0xff]
        %v1539 = vld [vmem:[%s1332 + $0x99] sm:$0xff]
        %v1540 = vld [vmem:[%s1332 + $0xa9] sm:$0xff]
        %v1541 = vld [vmem:[%s1332 + $0xb1] sm:$0xff]
        %v1542 = vld [vmem:[%s1332 + $0xc1] sm:$0xff]
        %v1543 = vld [vmem:[%s1332 + $0xc9] sm:$0xff]
        %v1544 = vld [vmem:[%s1332 + $0xd9] sm:$0xff]
        %v1545 = vld [vmem:[%s1332 + $0xe1] sm:$0xff]
        %v1546 = vld [vmem:[%s1332 + $0xf1] sm:$0xff]
        %v1547 = vld [vmem:[%s1332 + $0xf9] sm:$0xff]
        %v1548 = vld [vmem:[%s1332 + $0x109] sm:$0xff]
        %v1549 = vld [vmem:[%s1332 + $0x111] sm:$0xff]
        %v1550 = vld [vmem:[%s1332 + $0x121] sm:$0xff]
        %v1551 = vld [vmem:[%s1332 + $0x129] sm:$0xff]
        %v1552 = vld [vmem:[%s1332 + $0x139] sm:$0xff]
        %v1553 = vld [vmem:[%s1332 + $0x141] sm:$0xff]
        %v1554 = vld [vmem:[%s1332 + $0x151] sm:$0xff]
        %v1555 = vld [vmem:[%s1332 + $0x159] sm:$0xff]
        %v1556 = vld [vmem:[%s1332 + $0x169] sm:$0xff]
        %v1557 = vld [vmem:[%s1332 + $0x171] sm:$0xff]
        %1590 = vrot.lane.b32.xlu0 %v1526, 28
        %v1591 = vpop.permute.xlu0 %1590
        %1592 = vrot.lane.b32.xlu0 %v1527, 28
        %v1593 = vpop.permute.xlu0 %1592
        %1594 = vrot.lane.b32.xlu0 %v1528, 28
        %v1595 = vpop.permute.xlu0 %1594
        %1596 = vrot.lane.b32.xlu0 %v1529, 28
        %v1597 = vpop.permute.xlu0 %1596
        %1598 = vrot.lane.b32.xlu0 %v1530, 28
        %v1599 = vpop.permute.xlu0 %1598
        %1600 = vrot.lane.b32.xlu0 %v1531, 28
        %v1601 = vpop.permute.xlu0 %1600
        %1602 = vrot.lane.b32.xlu0 %v1532, 28
        %v1603 = vpop.permute.xlu0 %1602
        %1604 = vrot.lane.b32.xlu0 %v1533, 28
        %v1605 = vpop.permute.xlu0 %1604
        %1606 = vrot.lane.b32.xlu0 %v1534, 28
        %v1607 = vpop.permute.xlu0 %1606
        %1608 = vrot.lane.b32.xlu0 %v1535, 28
        %v1609 = vpop.permute.xlu0 %1608
        %1610 = vrot.lane.b32.xlu0 %v1536, 28
        %v1611 = vpop.permute.xlu0 %1610
        %1612 = vrot.lane.b32.xlu0 %v1537, 28
        %v1613 = vpop.permute.xlu0 %1612
        %1614 = vrot.lane.b32.xlu0 %v1538, 28
        %v1615 = vpop.permute.xlu0 %1614
        %1616 = vrot.lane.b32.xlu0 %v1539, 28
        %v1617 = vpop.permute.xlu0 %1616
        %1618 = vrot.lane.b32.xlu0 %v1540, 28
        %v1619 = vpop.permute.xlu0 %1618
        %1620 = vrot.lane.b32.xlu0 %v1541, 28
        %v1621 = vpop.permute.xlu0 %1620
        %1622 = vrot.lane.b32.xlu0 %v1542, 28
        %v1623 = vpop.permute.xlu0 %1622
        %1624 = vrot.lane.b32.xlu0 %v1543, 28
        %v1625 = vpop.permute.xlu0 %1624
        %1626 = vrot.lane.b32.xlu0 %v1544, 28
        %v1627 = vpop.permute.xlu0 %1626
        %1628 = vrot.lane.b32.xlu0 %v1545, 28
        %v1629 = vpop.permute.xlu0 %1628
        %1630 = vrot.lane.b32.xlu0 %v1546, 28
        %v1631 = vpop.permute.xlu0 %1630
        %1632 = vrot.lane.b32.xlu0 %v1547, 28
        %v1633 = vpop.permute.xlu0 %1632
        %1634 = vrot.lane.b32.xlu0 %v1548, 28
        %v1635 = vpop.permute.xlu0 %1634
        %1636 = vrot.lane.b32.xlu0 %v1549, 28
        %v1637 = vpop.permute.xlu0 %1636
        %1638 = vrot.lane.b32.xlu0 %v1550, 28
        %v1639 = vpop.permute.xlu0 %1638
        %1640 = vrot.lane.b32.xlu0 %v1551, 28
        %v1641 = vpop.permute.xlu0 %1640
        %1642 = vrot.lane.b32.xlu0 %v1552, 28
        %v1643 = vpop.permute.xlu0 %1642
        %1644 = vrot.lane.b32.xlu0 %v1553, 28
        %v1645 = vpop.permute.xlu0 %1644
        %1646 = vrot.lane.b32.xlu0 %v1554, 28
        %v1647 = vpop.permute.xlu0 %1646
        %1648 = vrot.lane.b32.xlu0 %v1555, 28
        %v1649 = vpop.permute.xlu0 %1648
        %1650 = vrot.lane.b32.xlu0 %v1556, 28
        %v1651 = vpop.permute.xlu0 %1650
        %1652 = vrot.lane.b32.xlu0 %v1557, 28
        %v1653 = vpop.permute.xlu0 %1652
        %vm1686 = vcmask 261344
        %1687 = vst.msk [vmem:[#allocation2] sm:$0xff] %vm1686, %v1591
        %1688 = vst.msk [vmem:[#allocation2 + $0x8] sm:$0xff] %vm1686, %v1593
        %1689 = vst.msk [vmem:[#allocation2 + $0x10] sm:$0xff] %vm1686, %v1595
        %1690 = vst.msk [vmem:[#allocation2 + $0x18] sm:$0xff] %vm1686, %v1597
        %1691 = vst.msk [vmem:[#allocation2 + $0x20] sm:$0xff] %vm1686, %v1599
        %1692 = vst.msk [vmem:[#allocation2 + $0x28] sm:$0xff] %vm1686, %v1601
        %1693 = vst.msk [vmem:[#allocation2 + $0x30] sm:$0xff] %vm1686, %v1603
        %1694 = vst.msk [vmem:[#allocation2 + $0x38] sm:$0xff] %vm1686, %v1605
        %1695 = vst.msk [vmem:[#allocation2 + $0x40] sm:$0xff] %vm1686, %v1607
        %1696 = vst.msk [vmem:[#allocation2 + $0x48] sm:$0xff] %vm1686, %v1609
        %1697 = vst.msk [vmem:[#allocation2 + $0x50] sm:$0xff] %vm1686, %v1611
        %1698 = vst.msk [vmem:[#allocation2 + $0x58] sm:$0xff] %vm1686, %v1613
        %1699 = vst.msk [vmem:[#allocation2 + $0x60] sm:$0xff] %vm1686, %v1615
        %1700 = vst.msk [vmem:[#allocation2 + $0x68] sm:$0xff] %vm1686, %v1617
        %1701 = vst.msk [vmem:[#allocation2 + $0x70] sm:$0xff] %vm1686, %v1619
        %1702 = vst.msk [vmem:[#allocation2 + $0x78] sm:$0xff] %vm1686, %v1621
        %1703 = vst.msk [vmem:[#allocation2 + $0x80] sm:$0xff] %vm1686, %v1623
        %1704 = vst.msk [vmem:[#allocation2 + $0x88] sm:$0xff] %vm1686, %v1625
        %1705 = vst.msk [vmem:[#allocation2 + $0x90] sm:$0xff] %vm1686, %v1627
        %1706 = vst.msk [vmem:[#allocation2 + $0x98] sm:$0xff] %vm1686, %v1629
        %1707 = vst.msk [vmem:[#allocation2 + $0xa0] sm:$0xff] %vm1686, %v1631
        %1708 = vst.msk [vmem:[#allocation2 + $0xa8] sm:$0xff] %vm1686, %v1633
        %1709 = vst.msk [vmem:[#allocation2 + $0xb0] sm:$0xff] %vm1686, %v1635
        %1710 = vst.msk [vmem:[#allocation2 + $0xb8] sm:$0xff] %vm1686, %v1637
        %1711 = vst.msk [vmem:[#allocation2 + $0xc0] sm:$0xff] %vm1686, %v1639
        %1712 = vst.msk [vmem:[#allocation2 + $0xc8] sm:$0xff] %vm1686, %v1641
        %1713 = vst.msk [vmem:[#allocation2 + $0xd0] sm:$0xff] %vm1686, %v1643
        %1714 = vst.msk [vmem:[#allocation2 + $0xd8] sm:$0xff] %vm1686, %v1645
        %1715 = vst.msk [vmem:[#allocation2 + $0xe0] sm:$0xff] %vm1686, %v1647
        %1716 = vst.msk [vmem:[#allocation2 + $0xe8] sm:$0xff] %vm1686, %v1649
        %1717 = vst.msk [vmem:[#allocation2 + $0xf0] sm:$0xff] %vm1686, %v1651
        %1718 = vst.msk [vmem:[#allocation2 + $0xf8] sm:$0xff] %vm1686, %v1653
        %v1719 = vld [vmem:[%s1332 + $0x2] sm:$0xff]
        %v1720 = vld [vmem:[%s1332 + $0xa] sm:$0xff]
        %v1721 = vld [vmem:[%s1332 + $0x1a] sm:$0xff]
        %v1722 = vld [vmem:[%s1332 + $0x22] sm:$0xff]
        %v1723 = vld [vmem:[%s1332 + $0x32] sm:$0xff]
        %v1724 = vld [vmem:[%s1332 + $0x3a] sm:$0xff]
        %v1725 = vld [vmem:[%s1332 + $0x4a] sm:$0xff]
        %v1726 = vld [vmem:[%s1332 + $0x52] sm:$0xff]
        %v1727 = vld [vmem:[%s1332 + $0x62] sm:$0xff]
        %v1728 = vld [vmem:[%s1332 + $0x6a] sm:$0xff]
        %v1729 = vld [vmem:[%s1332 + $0x7a] sm:$0xff]
        %v1730 = vld [vmem:[%s1332 + $0x82] sm:$0xff]
        %v1731 = vld [vmem:[%s1332 + $0x92] sm:$0xff]
        %v1732 = vld [vmem:[%s1332 + $0x9a] sm:$0xff]
        %v1733 = vld [vmem:[%s1332 + $0xaa] sm:$0xff]
        %v1734 = vld [vmem:[%s1332 + $0xb2] sm:$0xff]
        %v1735 = vld [vmem:[%s1332 + $0xc2] sm:$0xff]
        %v1736 = vld [vmem:[%s1332 + $0xca] sm:$0xff]
        %v1737 = vld [vmem:[%s1332 + $0xda] sm:$0xff]
        %v1738 = vld [vmem:[%s1332 + $0xe2] sm:$0xff]
        %v1739 = vld [vmem:[%s1332 + $0xf2] sm:$0xff]
        %v1740 = vld [vmem:[%s1332 + $0xfa] sm:$0xff]
        %v1741 = vld [vmem:[%s1332 + $0x10a] sm:$0xff]
        %v1742 = vld [vmem:[%s1332 + $0x112] sm:$0xff]
        %v1743 = vld [vmem:[%s1332 + $0x122] sm:$0xff]
        %v1744 = vld [vmem:[%s1332 + $0x12a] sm:$0xff]
        %v1745 = vld [vmem:[%s1332 + $0x13a] sm:$0xff]
        %v1746 = vld [vmem:[%s1332 + $0x142] sm:$0xff]
        %v1747 = vld [vmem:[%s1332 + $0x152] sm:$0xff]
        %v1748 = vld [vmem:[%s1332 + $0x15a] sm:$0xff]
        %v1749 = vld [vmem:[%s1332 + $0x16a] sm:$0xff]
        %v1750 = vld [vmem:[%s1332 + $0x172] sm:$0xff]
        %1783 = vrot.lane.b32.xlu0 %v1719, 32
        %v1784 = vpop.permute.xlu0 %1783
        %1785 = vrot.lane.b32.xlu0 %v1720, 32
        %v1786 = vpop.permute.xlu0 %1785
        %1787 = vrot.lane.b32.xlu0 %v1721, 32
        %v1788 = vpop.permute.xlu0 %1787
        %1789 = vrot.lane.b32.xlu0 %v1722, 32
        %v1790 = vpop.permute.xlu0 %1789
        %1791 = vrot.lane.b32.xlu0 %v1723, 32
        %v1792 = vpop.permute.xlu0 %1791
        %1793 = vrot.lane.b32.xlu0 %v1724, 32
        %v1794 = vpop.permute.xlu0 %1793
        %1795 = vrot.lane.b32.xlu0 %v1725, 32
        %v1796 = vpop.permute.xlu0 %1795
        %1797 = vrot.lane.b32.xlu0 %v1726, 32
        %v1798 = vpop.permute.xlu0 %1797
        %1799 = vrot.lane.b32.xlu0 %v1727, 32
        %v1800 = vpop.permute.xlu0 %1799
        %1801 = vrot.lane.b32.xlu0 %v1728, 32
        %v1802 = vpop.permute.xlu0 %1801
        %1803 = vrot.lane.b32.xlu0 %v1729, 32
        %v1804 = vpop.permute.xlu0 %1803
        %1805 = vrot.lane.b32.xlu0 %v1730, 32
        %v1806 = vpop.permute.xlu0 %1805
        %1807 = vrot.lane.b32.xlu0 %v1731, 32
        %v1808 = vpop.permute.xlu0 %1807
        %1809 = vrot.lane.b32.xlu0 %v1732, 32
        %v1810 = vpop.permute.xlu0 %1809
        %1811 = vrot.lane.b32.xlu0 %v1733, 32
        %v1812 = vpop.permute.xlu0 %1811
        %1813 = vrot.lane.b32.xlu0 %v1734, 32
        %v1814 = vpop.permute.xlu0 %1813
        %1815 = vrot.lane.b32.xlu0 %v1735, 32
        %v1816 = vpop.permute.xlu0 %1815
        %1817 = vrot.lane.b32.xlu0 %v1736, 32
        %v1818 = vpop.permute.xlu0 %1817
        %1819 = vrot.lane.b32.xlu0 %v1737, 32
        %v1820 = vpop.permute.xlu0 %1819
        %1821 = vrot.lane.b32.xlu0 %v1738, 32
        %v1822 = vpop.permute.xlu0 %1821
        %1823 = vrot.lane.b32.xlu0 %v1739, 32
        %v1824 = vpop.permute.xlu0 %1823
        %1825 = vrot.lane.b32.xlu0 %v1740, 32
        %v1826 = vpop.permute.xlu0 %1825
        %1827 = vrot.lane.b32.xlu0 %v1741, 32
        %v1828 = vpop.permute.xlu0 %1827
        %1829 = vrot.lane.b32.xlu0 %v1742, 32
        %v1830 = vpop.permute.xlu0 %1829
        %1831 = vrot.lane.b32.xlu0 %v1743, 32
        %v1832 = vpop.permute.xlu0 %1831
        %1833 = vrot.lane.b32.xlu0 %v1744, 32
        %v1834 = vpop.permute.xlu0 %1833
        %1835 = vrot.lane.b32.xlu0 %v1745, 32
        %v1836 = vpop.permute.xlu0 %1835
        %1837 = vrot.lane.b32.xlu0 %v1746, 32
        %v1838 = vpop.permute.xlu0 %1837
        %1839 = vrot.lane.b32.xlu0 %v1747, 32
        %v1840 = vpop.permute.xlu0 %1839
        %1841 = vrot.lane.b32.xlu0 %v1748, 32
        %v1842 = vpop.permute.xlu0 %1841
        %1843 = vrot.lane.b32.xlu0 %v1749, 32
        %v1844 = vpop.permute.xlu0 %1843
        %1845 = vrot.lane.b32.xlu0 %v1750, 32
        %v1846 = vpop.permute.xlu0 %1845
        %vm1879 = vcmask 294144
        %1880 = vst.msk [vmem:[#allocation2] sm:$0xff] %vm1879, %v1784
        %1881 = vst.msk [vmem:[#allocation2 + $0x8] sm:$0xff] %vm1879, %v1786
        %1882 = vst.msk [vmem:[#allocation2 + $0x10] sm:$0xff] %vm1879, %v1788
        %1883 = vst.msk [vmem:[#allocation2 + $0x18] sm:$0xff] %vm1879, %v1790
        %1884 = vst.msk [vmem:[#allocation2 + $0x20] sm:$0xff] %vm1879, %v1792
        %1885 = vst.msk [vmem:[#allocation2 + $0x28] sm:$0xff] %vm1879, %v1794
        %1886 = vst.msk [vmem:[#allocation2 + $0x30] sm:$0xff] %vm1879, %v1796
        %1887 = vst.msk [vmem:[#allocation2 + $0x38] sm:$0xff] %vm1879, %v1798
        %1888 = vst.msk [vmem:[#allocation2 + $0x40] sm:$0xff] %vm1879, %v1800
        %1889 = vst.msk [vmem:[#allocation2 + $0x48] sm:$0xff] %vm1879, %v1802
        %1890 = vst.msk [vmem:[#allocation2 + $0x50] sm:$0xff] %vm1879, %v1804
        %1891 = vst.msk [vmem:[#allocation2 + $0x58] sm:$0xff] %vm1879, %v1806
        %1892 = vst.msk [vmem:[#allocation2 + $0x60] sm:$0xff] %vm1879, %v1808
        %1893 = vst.msk [vmem:[#allocation2 + $0x68] sm:$0xff] %vm1879, %v1810
        %1894 = vst.msk [vmem:[#allocation2 + $0x70] sm:$0xff] %vm1879, %v1812
        %1895 = vst.msk [vmem:[#allocation2 + $0x78] sm:$0xff] %vm1879, %v1814
        %1896 = vst.msk [vmem:[#allocation2 + $0x80] sm:$0xff] %vm1879, %v1816
        %1897 = vst.msk [vmem:[#allocation2 + $0x88] sm:$0xff] %vm1879, %v1818
        %1898 = vst.msk [vmem:[#allocation2 + $0x90] sm:$0xff] %vm1879, %v1820
        %1899 = vst.msk [vmem:[#allocation2 + $0x98] sm:$0xff] %vm1879, %v1822
        %1900 = vst.msk [vmem:[#allocation2 + $0xa0] sm:$0xff] %vm1879, %v1824
        %1901 = vst.msk [vmem:[#allocation2 + $0xa8] sm:$0xff] %vm1879, %v1826
        %1902 = vst.msk [vmem:[#allocation2 + $0xb0] sm:$0xff] %vm1879, %v1828
        %1903 = vst.msk [vmem:[#allocation2 + $0xb8] sm:$0xff] %vm1879, %v1830
        %1904 = vst.msk [vmem:[#allocation2 + $0xc0] sm:$0xff] %vm1879, %v1832
        %1905 = vst.msk [vmem:[#allocation2 + $0xc8] sm:$0xff] %vm1879, %v1834
        %1906 = vst.msk [vmem:[#allocation2 + $0xd0] sm:$0xff] %vm1879, %v1836
        %1907 = vst.msk [vmem:[#allocation2 + $0xd8] sm:$0xff] %vm1879, %v1838
        %1908 = vst.msk [vmem:[#allocation2 + $0xe0] sm:$0xff] %vm1879, %v1840
        %1909 = vst.msk [vmem:[#allocation2 + $0xe8] sm:$0xff] %vm1879, %v1842
        %1910 = vst.msk [vmem:[#allocation2 + $0xf0] sm:$0xff] %vm1879, %v1844
        %1911 = vst.msk [vmem:[#allocation2 + $0xf8] sm:$0xff] %vm1879, %v1846
      $region40: #{tpu_custom_call.1} parent=35 // pred_fallthru
        _
      %v1912 = vld [vmem:[#allocation2] sm:$0xff]
      %v1913 = vld [vmem:[#allocation2 + $0x8] sm:$0xff]
      %v1914 = vld [vmem:[#allocation2 + $0x10] sm:$0xff]
      %v1915 = vld [vmem:[#allocation2 + $0x18] sm:$0xff]
      %v1916 = vld [vmem:[#allocation2 + $0x20] sm:$0xff]
      %v1917 = vld [vmem:[#allocation2 + $0x28] sm:$0xff]
      %v1918 = vld [vmem:[#allocation2 + $0x30] sm:$0xff]
      %v1919 = vld [vmem:[#allocation2 + $0x38] sm:$0xff]
      %v1920 = vld [vmem:[#allocation2 + $0x40] sm:$0xff]
      %v1921 = vld [vmem:[#allocation2 + $0x48] sm:$0xff]
      %v1922 = vld [vmem:[#allocation2 + $0x50] sm:$0xff]
      %v1923 = vld [vmem:[#allocation2 + $0x58] sm:$0xff]
      %v1924 = vld [vmem:[#allocation2 + $0x60] sm:$0xff]
      %v1925 = vld [vmem:[#allocation2 + $0x68] sm:$0xff]
      %v1926 = vld [vmem:[#allocation2 + $0x70] sm:$0xff]
      %v1927 = vld [vmem:[#allocation2 + $0x78] sm:$0xff]
      %v1928 = vld [vmem:[#allocation2 + $0x80] sm:$0xff]
      %v1929 = vld [vmem:[#allocation2 + $0x88] sm:$0xff]
      %v1930 = vld [vmem:[#allocation2 + $0x90] sm:$0xff]
      %v1931 = vld [vmem:[#allocation2 + $0x98] sm:$0xff]
      %v1932 = vld [vmem:[#allocation2 + $0xa0] sm:$0xff]
      %v1933 = vld [vmem:[#allocation2 + $0xa8] sm:$0xff]
      %v1934 = vld [vmem:[#allocation2 + $0xb0] sm:$0xff]
      %v1935 = vld [vmem:[#allocation2 + $0xb8] sm:$0xff]
      %v1936 = vld [vmem:[#allocation2 + $0xc0] sm:$0xff]
      %v1937 = vld [vmem:[#allocation2 + $0xc8] sm:$0xff]
      %v1938 = vld [vmem:[#allocation2 + $0xd0] sm:$0xff]
      %v1939 = vld [vmem:[#allocation2 + $0xd8] sm:$0xff]
      %v1940 = vld [vmem:[#allocation2 + $0xe0] sm:$0xff]
      %v1941 = vld [vmem:[#allocation2 + $0xe8] sm:$0xff]
      %v1942 = vld [vmem:[#allocation2 + $0xf0] sm:$0xff]
      %v1943 = vld [vmem:[#allocation2 + $0xf8] sm:$0xff]
      %v1944 = vld [vmem:[%s276] sm:$0xff]
      %v1945 = vld [vmem:[%s276 + $0x8] sm:$0xff]
      %v1946 = vld [vmem:[%s276 + $0x10] sm:$0xff]
      %v1947 = vld [vmem:[%s276 + $0x18] sm:$0xff]
      %v1948 = vld [vmem:[%s276 + $0x20] sm:$0xf]
      %vm1949 = vcmask 293888
      %v1951 = vsel %vm1949, %v1912, 0
      %v1954 = vsel %vm1949, %v1913, 0
      %v1957 = vsel %vm1949, %v1914, 0
      %v1960 = vsel %vm1949, %v1915, 0
      %v1963 = vsel %vm1949, %v1916, 0
      %v1966 = vsel %vm1949, %v1917, 0
      %v1969 = vsel %vm1949, %v1918, 0
      %v1972 = vsel %vm1949, %v1919, 0
      %v1975 = vsel %vm1949, %v1920, 0
      %v1978 = vsel %vm1949, %v1921, 0
      %v1981 = vsel %vm1949, %v1922, 0
      %v1984 = vsel %vm1949, %v1923, 0
      %v1987 = vsel %vm1949, %v1924, 0
      %v1990 = vsel %vm1949, %v1925, 0
      %v1993 = vsel %vm1949, %v1926, 0
      %v1996 = vsel %vm1949, %v1927, 0
      %v1999 = vsel %vm1949, %v1928, 0
      %v2002 = vsel %vm1949, %v1929, 0
      %v2005 = vsel %vm1949, %v1930, 0
      %v2008 = vsel %vm1949, %v1931, 0
      %v2011 = vsel %vm1949, %v1932, 0
      %v2014 = vsel %vm1949, %v1933, 0
      %v2017 = vsel %vm1949, %v1934, 0
      %v2020 = vsel %vm1949, %v1935, 0
      %v2023 = vsel %vm1949, %v1936, 0
      %v2026 = vsel %vm1949, %v1937, 0
      %v2029 = vsel %vm1949, %v1938, 0
      %v2032 = vsel %vm1949, %v1939, 0
      %v2035 = vsel %vm1949, %v1940, 0
      %v2038 = vsel %vm1949, %v1941, 0
      %v2041 = vsel %vm1949, %v1942, 0
      %v2044 = vsel %vm1949, %v1943, 0
      %vm2046 = vcmask 1043456
      %v2048 = vsel %vm2046, %v1948, 0
      %2050 = vmatprep.subr.mxu0 0.0
      %2051 = vmatpush1.msra.mxu0 0.0
      %2052 = vmatprep.subr.mxu0 0.0
      %2053 = vmatpush1.msra.mxu0 0.0
      %2054 = vmatprep.subr.mxu0 0.0
      %2055 = vmatpush1.msra.mxu0 0.0
      %2056 = vmatprep.subr.mxu0 0.0
      %2057 = vmatpush1.msra.mxu0 0.0
      %2058 = vmatprep.subr.mxu0 0.0
      %2059 = vmatpush1.msra.mxu0 0.0
      %2060 = vmatprep.subr.mxu0 0.0
      %2061 = vmatpush1.msra.mxu0 0.0
      %2062 = vmatprep.subr.mxu0 0.0
      %2063 = vmatpush1.msra.mxu0 0.0
      %2064 = vmatprep.subr.mxu0 0.0
      %2065 = vmatpush1.msra.mxu0 0.0
      %2066 = vmatprep.subr.mxu0 0.0
      %2067 = vmatpush1.msra.mxu0 0.0
      %2068 = vmatprep.subr.mxu0 0.0
      %2069 = vmatpush1.msra.mxu0 0.0
      %2070 = vmatprep.subr.mxu0 0.0
      %2071 = vmatpush1.msra.mxu0 0.0
      %2072 = vmatprep.subr.mxu0 0.0
      %2073 = vmatpush1.msra.mxu0 %v2048
      %2074 = vmatprep.subr.mxu0 0.0
      %2075 = vmatpush1.msra.mxu0 %v1947
      %2076 = vmatprep.subr.mxu0 0.0
      %2077 = vmatpush1.msra.mxu0 %v1946
      %2078 = vmatprep.subr.mxu0 0.0
      %2079 = vmatpush1.msra.mxu0 %v1945
      %2080 = vmatprep.subr.mxu0 0.0
      %2081 = vmatpush1.msra.mxu0 %v1944
      %2082 = vmatprep.subr.mxu0 0.0
      %2083 = vmatpush2.msra.mxu0 0.0
      %2084 = vmatprep.subr.mxu0 0.0
      %2085 = vmatpush2.msra.mxu0 0.0
      %2086 = vmatprep.subr.mxu0 0.0
      %2087 = vmatpush2.msra.mxu0 0.0
      %2088 = vmatprep.subr.mxu0 0.0
      %2089 = vmatpush2.msra.mxu0 0.0
      %2090 = vmatprep.subr.mxu0 0.0
      %2091 = vmatpush2.msra.mxu0 0.0
      %2092 = vmatprep.subr.mxu0 0.0
      %2093 = vmatpush2.msra.mxu0 0.0
      %2094 = vmatprep.subr.mxu0 0.0
      %2095 = vmatpush2.msra.mxu0 0.0
      %2096 = vmatprep.subr.mxu0 0.0
      %2097 = vmatpush2.msra.mxu0 0.0
      %2098 = vmatprep.subr.mxu0 0.0
      %2099 = vmatpush2.msra.mxu0 0.0
      %2100 = vmatprep.subr.mxu0 0.0
      %2101 = vmatpush2.msra.mxu0 0.0
      %2102 = vmatprep.subr.mxu0 0.0
      %2103 = vmatpush2.msra.mxu0 0.0
      %2104 = vmatprep.subr.mxu0 0.0
      %2105 = vmatpush2.msra.mxu0 0.0
      %2106 = vmatprep.subr.mxu0 0.0
      %2107 = vmatpush2.msra.mxu0 0.0
      %2108 = vmatprep.subr.mxu0 0.0
      %2109 = vmatpush2.msra.mxu0 0.0
      %2110 = vmatprep.subr.mxu0 0.0
      %2111 = vmatpush2.msra.mxu0 0.0
      %2112 = vmatprep.subr.mxu0 0.0
      %2113 = vmatpush2.msra.mxu0 0.0
      %2114 = vmatprep.mubr.f32.mxu0 0.0
      %2115 = vmatmul.mubr.f32.gmra.mxu0 %v1951
      %v2116 = vpop.f32.mrf.mxu0
      %v2117 = vadd.f32 0.0, %v2116
      %v2118 = vpop.f32.mrf.mxu0
      %2119 = vmatprep.mubr.f32.mxu0 0.0
      %2120 = vmatmul.mubr.f32.gmra.mxu0 %v1954
      %v2121 = vpop.f32.mrf.mxu0
      %v2122 = vadd.f32 0.0, %v2121
      %v2123 = vpop.f32.mrf.mxu0
      %2124 = vmatprep.mubr.f32.mxu0 0.0
      %2125 = vmatmul.mubr.f32.gmra.mxu0 %v1957
      %v2126 = vpop.f32.mrf.mxu0
      %v2127 = vadd.f32 0.0, %v2126
      %v2128 = vpop.f32.mrf.mxu0
      %2129 = vmatprep.mubr.f32.mxu0 0.0
      %2130 = vmatmul.mubr.f32.gmra.mxu0 %v1960
      %v2131 = vpop.f32.mrf.mxu0
      %v2132 = vadd.f32 0.0, %v2131
      %v2133 = vpop.f32.mrf.mxu0
      %2134 = vmatprep.mubr.f32.mxu0 0.0
      %2135 = vmatmul.mubr.f32.gmra.mxu0 %v1963
      %v2136 = vpop.f32.mrf.mxu0
      %v2137 = vadd.f32 0.0, %v2136
      %v2138 = vpop.f32.mrf.mxu0
      %2139 = vmatprep.mubr.f32.mxu0 0.0
      %2140 = vmatmul.mubr.f32.gmra.mxu0 %v1966
      %v2141 = vpop.f32.mrf.mxu0
      %v2142 = vadd.f32 0.0, %v2141
      %v2143 = vpop.f32.mrf.mxu0
      %2144 = vmatprep.mubr.f32.mxu0 0.0
      %2145 = vmatmul.mubr.f32.gmra.mxu0 %v1969
      %v2146 = vpop.f32.mrf.mxu0
      %v2147 = vadd.f32 0.0, %v2146
      %v2148 = vpop.f32.mrf.mxu0
      %2149 = vmatprep.mubr.f32.mxu0 0.0
      %2150 = vmatmul.mubr.f32.gmra.mxu0 %v1972
      %v2151 = vpop.f32.mrf.mxu0
      %v2152 = vadd.f32 0.0, %v2151
      %v2153 = vpop.f32.mrf.mxu0
      %2154 = vmatprep.mubr.f32.mxu0 0.0
      %2155 = vmatmul.mubr.f32.gmra.mxu0 %v1975
      %v2156 = vpop.f32.mrf.mxu0
      %v2157 = vadd.f32 0.0, %v2156
      %v2158 = vpop.f32.mrf.mxu0
      %2159 = vmatprep.mubr.f32.mxu0 0.0
      %2160 = vmatmul.mubr.f32.gmra.mxu0 %v1978
      %v2161 = vpop.f32.mrf.mxu0
      %v2162 = vadd.f32 0.0, %v2161
      %v2163 = vpop.f32.mrf.mxu0
      %2164 = vmatprep.mubr.f32.mxu0 0.0
      %2165 = vmatmul.mubr.f32.gmra.mxu0 %v1981
      %v2166 = vpop.f32.mrf.mxu0
      %v2167 = vadd.f32 0.0, %v2166
      %v2168 = vpop.f32.mrf.mxu0
      %2169 = vmatprep.mubr.f32.mxu0 0.0
      %2170 = vmatmul.mubr.f32.gmra.mxu0 %v1984
      %v2171 = vpop.f32.mrf.mxu0
      %v2172 = vadd.f32 0.0, %v2171
      %v2173 = vpop.f32.mrf.mxu0
      %2174 = vmatprep.mubr.f32.mxu0 0.0
      %2175 = vmatmul.mubr.f32.gmra.mxu0 %v1987
      %v2176 = vpop.f32.mrf.mxu0
      %v2177 = vadd.f32 0.0, %v2176
      %v2178 = vpop.f32.mrf.mxu0
      %2179 = vmatprep.mubr.f32.mxu0 0.0
      %2180 = vmatmul.mubr.f32.gmra.mxu0 %v1990
      %v2181 = vpop.f32.mrf.mxu0
      %v2182 = vadd.f32 0.0, %v2181
      %v2183 = vpop.f32.mrf.mxu0
      %2184 = vmatprep.mubr.f32.mxu0 0.0
      %2185 = vmatmul.mubr.f32.gmra.mxu0 %v1993
      %v2186 = vpop.f32.mrf.mxu0
      %v2187 = vadd.f32 0.0, %v2186
      %v2188 = vpop.f32.mrf.mxu0
      %2189 = vmatprep.mubr.f32.mxu0 0.0
      %2190 = vmatmul.mubr.f32.gmra.mxu0 %v1996
      %v2191 = vpop.f32.mrf.mxu0
      %v2192 = vadd.f32 0.0, %v2191
      %v2193 = vpop.f32.mrf.mxu0
      %2194 = vmatprep.mubr.f32.mxu0 0.0
      %2195 = vmatmul.mubr.f32.gmra.mxu0 %v1999
      %v2196 = vpop.f32.mrf.mxu0
      %v2197 = vadd.f32 0.0, %v2196
      %v2198 = vpop.f32.mrf.mxu0
      %2199 = vmatprep.mubr.f32.mxu0 0.0
      %2200 = vmatmul.mubr.f32.gmra.mxu0 %v2002
      %v2201 = vpop.f32.mrf.mxu0
      %v2202 = vadd.f32 0.0, %v2201
      %v2203 = vpop.f32.mrf.mxu0
      %2204 = vmatprep.mubr.f32.mxu0 0.0
      %2205 = vmatmul.mubr.f32.gmra.mxu0 %v2005
      %v2206 = vpop.f32.mrf.mxu0
      %v2207 = vadd.f32 0.0, %v2206
      %v2208 = vpop.f32.mrf.mxu0
      %2209 = vmatprep.mubr.f32.mxu0 0.0
      %2210 = vmatmul.mubr.f32.gmra.mxu0 %v2008
      %v2211 = vpop.f32.mrf.mxu0
      %v2212 = vadd.f32 0.0, %v2211
      %v2213 = vpop.f32.mrf.mxu0
      %2214 = vmatprep.mubr.f32.mxu0 0.0
      %2215 = vmatmul.mubr.f32.gmra.mxu0 %v2011
      %v2216 = vpop.f32.mrf.mxu0
      %v2217 = vadd.f32 0.0, %v2216
      %v2218 = vpop.f32.mrf.mxu0
      %2219 = vmatprep.mubr.f32.mxu0 0.0
      %2220 = vmatmul.mubr.f32.gmra.mxu0 %v2014
      %v2221 = vpop.f32.mrf.mxu0
      %v2222 = vadd.f32 0.0, %v2221
      %v2223 = vpop.f32.mrf.mxu0
      %2224 = vmatprep.mubr.f32.mxu0 0.0
      %2225 = vmatmul.mubr.f32.gmra.mxu0 %v2017
      %v2226 = vpop.f32.mrf.mxu0
      %v2227 = vadd.f32 0.0, %v2226
      %v2228 = vpop.f32.mrf.mxu0
      %2229 = vmatprep.mubr.f32.mxu0 0.0
      %2230 = vmatmul.mubr.f32.gmra.mxu0 %v2020
      %v2231 = vpop.f32.mrf.mxu0
      %v2232 = vadd.f32 0.0, %v2231
      %v2233 = vpop.f32.mrf.mxu0
      %2234 = vmatprep.mubr.f32.mxu0 0.0
      %2235 = vmatmul.mubr.f32.gmra.mxu0 %v2023
      %v2236 = vpop.f32.mrf.mxu0
      %v2237 = vadd.f32 0.0, %v2236
      %v2238 = vpop.f32.mrf.mxu0
      %2239 = vmatprep.mubr.f32.mxu0 0.0
      %2240 = vmatmul.mubr.f32.gmra.mxu0 %v2026
      %v2241 = vpop.f32.mrf.mxu0
      %v2242 = vadd.f32 0.0, %v2241
      %v2243 = vpop.f32.mrf.mxu0
      %2244 = vmatprep.mubr.f32.mxu0 0.0
      %2245 = vmatmul.mubr.f32.gmra.mxu0 %v2029
      %v2246 = vpop.f32.mrf.mxu0
      %v2247 = vadd.f32 0.0, %v2246
      %v2248 = vpop.f32.mrf.mxu0
      %2249 = vmatprep.mubr.f32.mxu0 0.0
      %2250 = vmatmul.mubr.f32.gmra.mxu0 %v2032
      %v2251 = vpop.f32.mrf.mxu0
      %v2252 = vadd.f32 0.0, %v2251
      %v2253 = vpop.f32.mrf.mxu0
      %2254 = vmatprep.mubr.f32.mxu0 0.0
      %2255 = vmatmul.mubr.f32.gmra.mxu0 %v2035
      %v2256 = vpop.f32.mrf.mxu0
      %v2257 = vadd.f32 0.0, %v2256
      %v2258 = vpop.f32.mrf.mxu0
      %2259 = vmatprep.mubr.f32.mxu0 0.0
      %2260 = vmatmul.mubr.f32.gmra.mxu0 %v2038
      %v2261 = vpop.f32.mrf.mxu0
      %v2262 = vadd.f32 0.0, %v2261
      %v2263 = vpop.f32.mrf.mxu0
      %2264 = vmatprep.mubr.f32.mxu0 0.0
      %2265 = vmatmul.mubr.f32.gmra.mxu0 %v2041
      %v2266 = vpop.f32.mrf.mxu0
      %v2267 = vadd.f32 0.0, %v2266
      %v2268 = vpop.f32.mrf.mxu0
      %2269 = vmatprep.mubr.f32.mxu0 0.0
      %2270 = vmatmul.mubr.f32.gmra.mxu0 %v2044
      %v2271 = vpop.f32.mrf.mxu0
      %v2272 = vadd.f32 0.0, %v2271
      %v2273 = vpop.f32.mrf.mxu0
      %2274 = vdwg.mxu0
      %v2275 = vld [vmem:[%s279] sm:$0x1]
      %v2277 = vlaneseq
      %v2278 = vshrl.u32 %v2277, 7
      %v2279 = vsub.s32 0, %v2278
      %v2280 = vrot.slane %v2275, %v2279
      %v2282 = vmul.f32 %v2117, %v2280
      %v2283 = vmul.f32 %v2122, %v2280
      %v2284 = vmul.f32 %v2127, %v2280
      %v2285 = vmul.f32 %v2132, %v2280
      %v2286 = vmul.f32 %v2137, %v2280
      %v2287 = vmul.f32 %v2142, %v2280
      %v2288 = vmul.f32 %v2147, %v2280
      %v2289 = vmul.f32 %v2152, %v2280
      %v2290 = vmul.f32 %v2157, %v2280
      %v2291 = vmul.f32 %v2162, %v2280
      %v2292 = vmul.f32 %v2167, %v2280
      %v2293 = vmul.f32 %v2172, %v2280
      %v2294 = vmul.f32 %v2177, %v2280
      %v2295 = vmul.f32 %v2182, %v2280
      %v2296 = vmul.f32 %v2187, %v2280
      %v2297 = vmul.f32 %v2192, %v2280
      %v2298 = vmul.f32 %v2197, %v2280
      %v2299 = vmul.f32 %v2202, %v2280
      %v2300 = vmul.f32 %v2207, %v2280
      %v2301 = vmul.f32 %v2212, %v2280
      %v2302 = vmul.f32 %v2217, %v2280
      %v2303 = vmul.f32 %v2222, %v2280
      %v2304 = vmul.f32 %v2227, %v2280
      %v2305 = vmul.f32 %v2232, %v2280
      %v2306 = vmul.f32 %v2237, %v2280
      %v2307 = vmul.f32 %v2242, %v2280
      %v2308 = vmul.f32 %v2247, %v2280
      %v2309 = vmul.f32 %v2252, %v2280
      %v2310 = vmul.f32 %v2257, %v2280
      %v2311 = vmul.f32 %v2262, %v2280
      %v2312 = vmul.f32 %v2267, %v2280
      %v2313 = vmul.f32 %v2272, %v2280
      %v2314 = vld [vmem:[%s282] sm:$0x1]
      %v2316 = vlaneseq
      %v2317 = vshrl.u32 %v2316, 7
      %v2318 = vsub.s32 0, %v2317
      %v2319 = vrot.slane %v2314, %v2318
      %v2321 = vadd.f32 %v2282, %v2319
      %v2322 = vadd.f32 %v2283, %v2319
      %v2323 = vadd.f32 %v2284, %v2319
      %v2324 = vadd.f32 %v2285, %v2319
      %v2325 = vadd.f32 %v2286, %v2319
      %v2326 = vadd.f32 %v2287, %v2319
      %v2327 = vadd.f32 %v2288, %v2319
      %v2328 = vadd.f32 %v2289, %v2319
      %v2329 = vadd.f32 %v2290, %v2319
      %v2330 = vadd.f32 %v2291, %v2319
      %v2331 = vadd.f32 %v2292, %v2319
      %v2332 = vadd.f32 %v2293, %v2319
      %v2333 = vadd.f32 %v2294, %v2319
      %v2334 = vadd.f32 %v2295, %v2319
      %v2335 = vadd.f32 %v2296, %v2319
      %v2336 = vadd.f32 %v2297, %v2319
      %v2337 = vadd.f32 %v2298, %v2319
      %v2338 = vadd.f32 %v2299, %v2319
      %v2339 = vadd.f32 %v2300, %v2319
      %v2340 = vadd.f32 %v2301, %v2319
      %v2341 = vadd.f32 %v2302, %v2319
      %v2342 = vadd.f32 %v2303, %v2319
      %v2343 = vadd.f32 %v2304, %v2319
      %v2344 = vadd.f32 %v2305, %v2319
      %v2345 = vadd.f32 %v2306, %v2319
      %v2346 = vadd.f32 %v2307, %v2319
      %v2347 = vadd.f32 %v2308, %v2319
      %v2348 = vadd.f32 %v2309, %v2319
      %v2349 = vadd.f32 %v2310, %v2319
      %v2350 = vadd.f32 %v2311, %v2319
      %v2351 = vadd.f32 %v2312, %v2319
      %v2352 = vadd.f32 %v2313, %v2319
      %v2353 = vxor.u32 %v2321, 2147483648
      %v2354 = vxor.u32 %v2322, 2147483648
      %v2355 = vxor.u32 %v2323, 2147483648
      %v2356 = vxor.u32 %v2324, 2147483648
      %v2357 = vxor.u32 %v2325, 2147483648
      %v2358 = vxor.u32 %v2326, 2147483648
      %v2359 = vxor.u32 %v2327, 2147483648
      %v2360 = vxor.u32 %v2328, 2147483648
      %v2361 = vxor.u32 %v2329, 2147483648
      %v2362 = vxor.u32 %v2330, 2147483648
      %v2363 = vxor.u32 %v2331, 2147483648
      %v2364 = vxor.u32 %v2332, 2147483648
      %v2365 = vxor.u32 %v2333, 2147483648
      %v2366 = vxor.u32 %v2334, 2147483648
      %v2367 = vxor.u32 %v2335, 2147483648
      %v2368 = vxor.u32 %v2336, 2147483648
      %v2369 = vxor.u32 %v2337, 2147483648
      %v2370 = vxor.u32 %v2338, 2147483648
      %v2371 = vxor.u32 %v2339, 2147483648
      %v2372 = vxor.u32 %v2340, 2147483648
      %v2373 = vxor.u32 %v2341, 2147483648
      %v2374 = vxor.u32 %v2342, 2147483648
      %v2375 = vxor.u32 %v2343, 2147483648
      %v2376 = vxor.u32 %v2344, 2147483648
      %v2377 = vxor.u32 %v2345, 2147483648
      %v2378 = vxor.u32 %v2346, 2147483648
      %v2379 = vxor.u32 %v2347, 2147483648
      %v2380 = vxor.u32 %v2348, 2147483648
      %v2381 = vxor.u32 %v2349, 2147483648
      %v2382 = vxor.u32 %v2350, 2147483648
      %v2383 = vxor.u32 %v2351, 2147483648
      %v2384 = vxor.u32 %v2352, 2147483648
      %v2385 = vmul.f32 %v2353, 1.442695
      %v2386 = vpow.pop %v2385
      %v2387 = vmul.f32 %v2354, 1.442695
      %v2388 = vpow.pop %v2387
      %v2389 = vmul.f32 %v2355, 1.442695
      %v2390 = vpow.pop %v2389
      %v2391 = vmul.f32 %v2356, 1.442695
      %v2392 = vpow.pop %v2391
      %v2393 = vmul.f32 %v2357, 1.442695
      %v2394 = vpow.pop %v2393
      %v2395 = vmul.f32 %v2358, 1.442695
      %v2396 = vpow.pop %v2395
      %v2397 = vmul.f32 %v2359, 1.442695
      %v2398 = vpow.pop %v2397
      %v2399 = vmul.f32 %v2360, 1.442695
      %v2400 = vpow.pop %v2399
      %v2401 = vmul.f32 %v2361, 1.442695
      %v2402 = vpow.pop %v2401
      %v2403 = vmul.f32 %v2362, 1.442695
      %v2404 = vpow.pop %v2403
      %v2405 = vmul.f32 %v2363, 1.442695
      %v2406 = vpow.pop %v2405
      %v2407 = vmul.f32 %v2364, 1.442695
      %v2408 = vpow.pop %v2407
      %v2409 = vmul.f32 %v2365, 1.442695
      %v2410 = vpow.pop %v2409
      %v2411 = vmul.f32 %v2366, 1.442695
      %v2412 = vpow.pop %v2411
      %v2413 = vmul.f32 %v2367, 1.442695
      %v2414 = vpow.pop %v2413
      %v2415 = vmul.f32 %v2368, 1.442695
      %v2416 = vpow.pop %v2415
      %v2417 = vmul.f32 %v2369, 1.442695
      %v2418 = vpow.pop %v2417
      %v2419 = vmul.f32 %v2370, 1.442695
      %v2420 = vpow.pop %v2419
      %v2421 = vmul.f32 %v2371, 1.442695
      %v2422 = vpow.pop %v2421
      %v2423 = vmul.f32 %v2372, 1.442695
      %v2424 = vpow.pop %v2423
      %v2425 = vmul.f32 %v2373, 1.442695
      %v2426 = vpow.pop %v2425
      %v2427 = vmul.f32 %v2374, 1.442695
      %v2428 = vpow.pop %v2427
      %v2429 = vmul.f32 %v2375, 1.442695
      %v2430 = vpow.pop %v2429
      %v2431 = vmul.f32 %v2376, 1.442695
      %v2432 = vpow.pop %v2431
      %v2433 = vmul.f32 %v2377, 1.442695
      %v2434 = vpow.pop %v2433
      %v2435 = vmul.f32 %v2378, 1.442695
      %v2436 = vpow.pop %v2435
      %v2437 = vmul.f32 %v2379, 1.442695
      %v2438 = vpow.pop %v2437
      %v2439 = vmul.f32 %v2380, 1.442695
      %v2440 = vpow.pop %v2439
      %v2441 = vmul.f32 %v2381, 1.442695
      %v2442 = vpow.pop %v2441
      %v2443 = vmul.f32 %v2382, 1.442695
      %v2444 = vpow.pop %v2443
      %v2445 = vmul.f32 %v2383, 1.442695
      %v2446 = vpow.pop %v2445
      %v2447 = vmul.f32 %v2384, 1.442695
      %v2448 = vpow.pop %v2447
      %v2449 = vadd.f32 %v2386, 1.0
      %v2450 = vadd.f32 %v2388, 1.0
      %v2451 = vadd.f32 %v2390, 1.0
      %v2452 = vadd.f32 %v2392, 1.0
      %v2453 = vadd.f32 %v2394, 1.0
      %v2454 = vadd.f32 %v2396, 1.0
      %v2455 = vadd.f32 %v2398, 1.0
      %v2456 = vadd.f32 %v2400, 1.0
      %v2457 = vadd.f32 %v2402, 1.0
      %v2458 = vadd.f32 %v2404, 1.0
      %v2459 = vadd.f32 %v2406, 1.0
      %v2460 = vadd.f32 %v2408, 1.0
      %v2461 = vadd.f32 %v2410, 1.0
      %v2462 = vadd.f32 %v2412, 1.0
      %v2463 = vadd.f32 %v2414, 1.0
      %v2464 = vadd.f32 %v2416, 1.0
      %v2465 = vadd.f32 %v2418, 1.0
      %v2466 = vadd.f32 %v2420, 1.0
      %v2467 = vadd.f32 %v2422, 1.0
      %v2468 = vadd.f32 %v2424, 1.0
      %v2469 = vadd.f32 %v2426, 1.0
      %v2470 = vadd.f32 %v2428, 1.0
      %v2471 = vadd.f32 %v2430, 1.0
      %v2472 = vadd.f32 %v2432, 1.0
      %v2473 = vadd.f32 %v2434, 1.0
      %v2474 = vadd.f32 %v2436, 1.0
      %v2475 = vadd.f32 %v2438, 1.0
      %v2476 = vadd.f32 %v2440, 1.0
      %v2477 = vadd.f32 %v2442, 1.0
      %v2478 = vadd.f32 %v2444, 1.0
      %v2479 = vadd.f32 %v2446, 1.0
      %v2480 = vadd.f32 %v2448, 1.0
      %v2481 = vrcp.pop %v2449
      %v2482 = vmul.f32 1.0, %v2481
      %v2483 = vrcp.pop %v2450
      %v2484 = vmul.f32 1.0, %v2483
      %v2485 = vrcp.pop %v2451
      %v2486 = vmul.f32 1.0, %v2485
      %v2487 = vrcp.pop %v2452
      %v2488 = vmul.f32 1.0, %v2487
      %v2489 = vrcp.pop %v2453
      %v2490 = vmul.f32 1.0, %v2489
      %v2491 = vrcp.pop %v2454
      %v2492 = vmul.f32 1.0, %v2491
      %v2493 = vrcp.pop %v2455
      %v2494 = vmul.f32 1.0, %v2493
      %v2495 = vrcp.pop %v2456
      %v2496 = vmul.f32 1.0, %v2495
      %v2497 = vrcp.pop %v2457
      %v2498 = vmul.f32 1.0, %v2497
      %v2499 = vrcp.pop %v2458
      %v2500 = vmul.f32 1.0, %v2499
      %v2501 = vrcp.pop %v2459
      %v2502 = vmul.f32 1.0, %v2501
      %v2503 = vrcp.pop %v2460
      %v2504 = vmul.f32 1.0, %v2503
      %v2505 = vrcp.pop %v2461
      %v2506 = vmul.f32 1.0, %v2505
      %v2507 = vrcp.pop %v2462
      %v2508 = vmul.f32 1.0, %v2507
      %v2509 = vrcp.pop %v2463
      %v2510 = vmul.f32 1.0, %v2509
      %v2511 = vrcp.pop %v2464
      %v2512 = vmul.f32 1.0, %v2511
      %v2513 = vrcp.pop %v2465
      %v2514 = vmul.f32 1.0, %v2513
      %v2515 = vrcp.pop %v2466
      %v2516 = vmul.f32 1.0, %v2515
      %v2517 = vrcp.pop %v2467
      %v2518 = vmul.f32 1.0, %v2517
      %v2519 = vrcp.pop %v2468
      %v2520 = vmul.f32 1.0, %v2519
      %v2521 = vrcp.pop %v2469
      %v2522 = vmul.f32 1.0, %v2521
      %v2523 = vrcp.pop %v2470
      %v2524 = vmul.f32 1.0, %v2523
      %v2525 = vrcp.pop %v2471
      %v2526 = vmul.f32 1.0, %v2525
      %v2527 = vrcp.pop %v2472
      %v2528 = vmul.f32 1.0, %v2527
      %v2529 = vrcp.pop %v2473
      %v2530 = vmul.f32 1.0, %v2529
      %v2531 = vrcp.pop %v2474
      %v2532 = vmul.f32 1.0, %v2531
      %v2533 = vrcp.pop %v2475
      %v2534 = vmul.f32 1.0, %v2533
      %v2535 = vrcp.pop %v2476
      %v2536 = vmul.f32 1.0, %v2535
      %v2537 = vrcp.pop %v2477
      %v2538 = vmul.f32 1.0, %v2537
      %v2539 = vrcp.pop %v2478
      %v2540 = vmul.f32 1.0, %v2539
      %v2541 = vrcp.pop %v2479
      %v2542 = vmul.f32 1.0, %v2541
      %v2543 = vrcp.pop %v2480
      %v2544 = vmul.f32 1.0, %v2543
      %v2545 = vmul.f32 %v2321, %v2482
      %v2546 = vmul.f32 %v2322, %v2484
      %v2547 = vmul.f32 %v2323, %v2486
      %v2548 = vmul.f32 %v2324, %v2488
      %v2549 = vmul.f32 %v2325, %v2490
      %v2550 = vmul.f32 %v2326, %v2492
      %v2551 = vmul.f32 %v2327, %v2494
      %v2552 = vmul.f32 %v2328, %v2496
      %v2553 = vmul.f32 %v2329, %v2498
      %v2554 = vmul.f32 %v2330, %v2500
      %v2555 = vmul.f32 %v2331, %v2502
      %v2556 = vmul.f32 %v2332, %v2504
      %v2557 = vmul.f32 %v2333, %v2506
      %v2558 = vmul.f32 %v2334, %v2508
      %v2559 = vmul.f32 %v2335, %v2510
      %v2560 = vmul.f32 %v2336, %v2512
      %v2561 = vmul.f32 %v2337, %v2514
      %v2562 = vmul.f32 %v2338, %v2516
      %v2563 = vmul.f32 %v2339, %v2518
      %v2564 = vmul.f32 %v2340, %v2520
      %v2565 = vmul.f32 %v2341, %v2522
      %v2566 = vmul.f32 %v2342, %v2524
      %v2567 = vmul.f32 %v2343, %v2526
      %v2568 = vmul.f32 %v2344, %v2528
      %v2569 = vmul.f32 %v2345, %v2530
      %v2570 = vmul.f32 %v2346, %v2532
      %v2571 = vmul.f32 %v2347, %v2534
      %v2572 = vmul.f32 %v2348, %v2536
      %v2573 = vmul.f32 %v2349, %v2538
      %v2574 = vmul.f32 %v2350, %v2540
      %v2575 = vmul.f32 %v2351, %v2542
      %v2576 = vmul.f32 %v2352, %v2544
      %vm2577 = vcmask 64512
      %2578 = vst.msk [vmem:[%s295] sm:$0xff] %vm2577, %v2545
      %2579 = vst.msk [vmem:[%s295 + $0x8] sm:$0xff] %vm2577, %v2546
      %2580 = vst.msk [vmem:[%s295 + $0x10] sm:$0xff] %vm2577, %v2547
      %2581 = vst.msk [vmem:[%s295 + $0x18] sm:$0xff] %vm2577, %v2548
      %2582 = vst.msk [vmem:[%s295 + $0x20] sm:$0xff] %vm2577, %v2549
      %2583 = vst.msk [vmem:[%s295 + $0x28] sm:$0xff] %vm2577, %v2550
      %2584 = vst.msk [vmem:[%s295 + $0x30] sm:$0xff] %vm2577, %v2551
      %2585 = vst.msk [vmem:[%s295 + $0x38] sm:$0xff] %vm2577, %v2552
      %2586 = vst.msk [vmem:[%s295 + $0x40] sm:$0xff] %vm2577, %v2553
      %2587 = vst.msk [vmem:[%s295 + $0x48] sm:$0xff] %vm2577, %v2554
      %2588 = vst.msk [vmem:[%s295 + $0x50] sm:$0xff] %vm2577, %v2555
      %2589 = vst.msk [vmem:[%s295 + $0x58] sm:$0xff] %vm2577, %v2556
      %2590 = vst.msk [vmem:[%s295 + $0x60] sm:$0xff] %vm2577, %v2557
      %2591 = vst.msk [vmem:[%s295 + $0x68] sm:$0xff] %vm2577, %v2558
      %2592 = vst.msk [vmem:[%s295 + $0x70] sm:$0xff] %vm2577, %v2559
      %2593 = vst.msk [vmem:[%s295 + $0x78] sm:$0xff] %vm2577, %v2560
      %2594 = vst.msk [vmem:[%s295 + $0x80] sm:$0xff] %vm2577, %v2561
      %2595 = vst.msk [vmem:[%s295 + $0x88] sm:$0xff] %vm2577, %v2562
      %2596 = vst.msk [vmem:[%s295 + $0x90] sm:$0xff] %vm2577, %v2563
      %2597 = vst.msk [vmem:[%s295 + $0x98] sm:$0xff] %vm2577, %v2564
      %2598 = vst.msk [vmem:[%s295 + $0xa0] sm:$0xff] %vm2577, %v2565
      %2599 = vst.msk [vmem:[%s295 + $0xa8] sm:$0xff] %vm2577, %v2566
      %2600 = vst.msk [vmem:[%s295 + $0xb0] sm:$0xff] %vm2577, %v2567
      %2601 = vst.msk [vmem:[%s295 + $0xb8] sm:$0xff] %vm2577, %v2568
      %2602 = vst.msk [vmem:[%s295 + $0xc0] sm:$0xff] %vm2577, %v2569
      %2603 = vst.msk [vmem:[%s295 + $0xc8] sm:$0xff] %vm2577, %v2570
      %2604 = vst.msk [vmem:[%s295 + $0xd0] sm:$0xff] %vm2577, %v2571
      %2605 = vst.msk [vmem:[%s295 + $0xd8] sm:$0xff] %vm2577, %v2572
      %2606 = vst.msk [vmem:[%s295 + $0xe0] sm:$0xff] %vm2577, %v2573
      %2607 = vst.msk [vmem:[%s295 + $0xe8] sm:$0xff] %vm2577, %v2574
      %2608 = vst.msk [vmem:[%s295 + $0xf0] sm:$0xff] %vm2577, %v2575
      %2609 = vst.msk [vmem:[%s295 + $0xf8] sm:$0xff] %vm2577, %v2576
      %s2610 = smul.u32 16, %s21
      %p2611 = scmp.lt.s32.totalorder %s20, 1
      %s2612 = scalar_select %p2611, %s20, 1
      %p2613 = scmp.lt.s32.totalorder %s2610, 15
      %s2614 = scalar_select %p2613, %s2610, 15
      %p2615 = scmp.lt.s32.totalorder %s22, 0
      %s2616 = scalar_select %p2615, %s22, 0
      %s2617 = smul.addr %s2614, 2
      %s2618 = sadd.s32 %s2616, %s2617
      %s2619 = smul.addr %s2612, 32
      %s2620 = sadd.s32 %s2618, %s2619
      %s2621 = smul.addr %s2620, 8
      %s2622 = scalar_lea.vmem %s4, %s2621
      // Predicated region
      $region41: #{tpu_custom_call.1} parent=35 // pred_check
        %p2623 = pneg %p162
      $region42: #{tpu_custom_call.1} parent=35 // pred_check_branch
        %2625 = sbr.rel (%p2623) target = $region44
      $region43: #{tpu_custom_call.1} parent=35 // pred_region
        %s2626 = smul.u32 16, %s21
      $region44: #{tpu_custom_call.1} parent=35 // pred_fallthru
        _
    $region36: #{tpu_custom_call.1} parent=5 // pred_fallthru
      _
    %p2627 = scmp.le.s32.totalorder 2, %s10
    // Predicated region
    $region45: #{tpu_custom_call.1} parent=5 // pred_check
      %p2628 = pneg %p2627
    $region46: #{tpu_custom_call.1} parent=5 // pred_check_branch
      %2630 = sbr.rel (%p2628) target = $region48
    $region47: #{tpu_custom_call.1} parent=5 // pred_region
      %s2631 = ssub.s32 %s10, 2
      // Predicated region
      $region49: #{tpu_custom_call.1} parent=47 // pred_check
        %p2632 = pneg %p168
      $region50: #{tpu_custom_call.1} parent=47 // pred_check_branch
        %2634 = sbr.rel (%p2632) target = $region52
      $region51: #{tpu_custom_call.1} parent=47 // pred_region
        %s2635 = smul.u32 16, %s24
        %p2636 = scmp.lt.s32.totalorder %s23, 1
        %s2637 = scalar_select %p2636, %s23, 1
        %p2638 = scmp.lt.s32.totalorder %s2635, 15
        %s2639 = scalar_select %p2638, %s2635, 15
        %p2640 = scmp.lt.s32.totalorder %s25, 0
        %s2641 = scalar_select %p2640, %s25, 0
        %s2642 = smul.addr %s2639, 2
        %s2643 = sadd.s32 %s2641, %s2642
        %s2644 = smul.addr %s2637, 32
        %s2645 = sadd.s32 %s2643, %s2644
        %s2646 = smul.addr %s2645, 8
        %s2647 = scalar_lea.vmem %s4, %s2646
      $region52: #{tpu_custom_call.1} parent=47 // pred_fallthru
        _
    $region48: #{tpu_custom_call.1} parent=5 // pred_fallthru
      _
  $region6: #{tpu_custom_call.1} parent=0 // loop_footer
    %s14 = sadd.s32 1, %s10
  $region7: #{tpu_custom_call.1} parent=0 // loop_footer_branch
    %9 = sbr.rel target = $region3
  $region8: #{tpu_custom_call.1} parent=0 // loop_exit
    _

</llo_original>
